<compile_context>
chip_gen: v7x
topology: tpu7x:2x2x1
jax: 0.10.0
libtpu: 0.0.40
codegen_flags: <defaults>
</compile_context>

<pallas_src>
import functools

import jax
import jax.numpy as jnp
import numpy as np
from jax.experimental import pallas as pl
from jax.experimental.pallas import tpu as pltpu

DT = 0.5
DX = 0.01

# Nonzero taps of lap_2d_op[5]: (row offset, col offset, weight).  Used by the
# plain-JAX reference; the kernel uses precomputed per-lane weights instead.
LAP5_TAPS = (
    (-2, 0, -1.0 / 12.0),
    (-1, 0, 4.0 / 3.0),
    (0, -2, -1.0 / 12.0),
    (0, -1, 4.0 / 3.0),
    (0, 0, -5.0),
    (0, 1, 4.0 / 3.0),
    (0, 2, -1.0 / 12.0),
    (1, 0, 4.0 / 3.0),
    (2, 0, -1.0 / 12.0),
)

_VMEM_LIMIT = 40 * 1024 * 1024   # <= ~48 MiB so it also fits v7x (64 MiB phys)
_LIVE_BUFFERS = 20               # ~live (bt, HWp) f32 temporaries per RK stage


def _round_up(x, m):
    return (x + m - 1) // m * m


@functools.lru_cache(maxsize=None)
def _stencil_consts(H, W, HWp):
    """Per-lane constants for the flattened (row-major) field.

    Returns:
      wts:   (8, HWp) f64 -- tap weight * 1/dx^2, zeroed where the tap falls
             outside the HxW image (zero-padded 'same' conv) or on a pad lane.
             Tap order matches the kernel's shift list:
             (dc=-1, dc=+1, dc=-2, dc=+2, dr=-1, dr=+1, dr=-2, dr=+2).
      pmask: (4, HWp) f64 -- 1.0 where padMethod overwrites the lane, order
             (col==W-1, col==0, row==0, row==H-1).
    """
    HW = H * W
    idx = np.arange(HWp)
    real = idx < HW
    col = np.where(real, idx % W, -1_000_000)   # sentinel: pad lanes never match
    row = np.where(real, idx // W, -1_000_000)
    inv_dx2 = 1.0 / (DX * DX)
    w1 = (4.0 / 3.0) * inv_dx2
    w2 = (-1.0 / 12.0) * inv_dx2
    taps = ((0, -1, w1), (0, 1, w1), (0, -2, w2), (0, 2, w2),
            (-1, 0, w1), (1, 0, w1), (-2, 0, w2), (2, 0, w2))
    wts = np.zeros((8, HWp), np.float64)
    for t, (dr, dc, wt) in enumerate(taps):
        ok = (real & (row + dr >= 0) & (row + dr < H)
              & (col + dc >= 0) & (col + dc < W))
        wts[t] = np.where(ok, wt, 0.0)
    pmask = np.stack([
        (col == W - 1),   # h[..., -1]    = h[..., -2]
        (col == 0),       # h[..., 0]     = h[..., 1]
        (row == 0),       # h[..., 0, :]  = h[..., 1, :]
        (row == H - 1),   # h[..., -1, :] = h[..., -2, :]
    ]).astype(np.float64)
    return wts, pmask


# ---------------------------------------------------------------------------
# Pallas kernel: full RK4 update for a (bt, HWp) chunk of flattened fields
# ---------------------------------------------------------------------------
def _rcnn_rk4_kernel(k_ref, w_ref, pm_ref, u_ref, out_ref, *, W):
    HWp = u_ref.shape[1]
    u0 = u_ref[...]                       # (bt, HWp) float32, lane-dense
    k = k_ref[0]                          # scalar diffusivity (nn.Parameter k)

    def sh(x, d):
        # lane t <- x[t + d] (per batch row).  Circular XLU lane rotation; any
        # wrapped / off-image read carries zero weight or is masked off.
        return pltpu.roll(x, shift=(-d) % HWp, axis=1)

    # ---- per-lane constants, built once and reused by all 4 RK stages ------
    pm = pm_ref[...] != 0.0               # (4, HWp) replicate-pad destinations
    m_cL, m_c0, m_r0, m_rL = (pm[i:i + 1, :] for i in range(4))
    wk = k * w_ref[...]                   # (8, HWp): k * tap weight / dx^2 * valid
    wts = [wk[i:i + 1, :] for i in range(8)]
    a0 = k * (-5.0 / (DX * DX))           # centre tap (always valid on real lanes)
    shifts = (-1, 1, -2, 2, -W, W, -2 * W, 2 * W)

    def pad(x):
        # RCNNCell.padMethod (cols then rows).  For H, W >= 3 the two column
        # writes (and the two row writes) are independent, so the dependency
        # chain is 2 levels (2 rolls deep) instead of 4.
        pc = jnp.where(m_c0, sh(x, 1), jnp.where(m_cL, sh(x, -1), x))
        return jnp.where(m_r0, sh(pc, W), jnp.where(m_rL, sh(pc, -W), pc))

    def k_lap(p):
        # k * W_laplace(p): one weighted roll per tap; validity, tap weight,
        # 1/dx^2 and k are all folded into wts (no selects, no zeros buffer).
        t = [w * sh(p, d) for w, d in zip(wts, shifts)]
        return (((t[0] + t[1]) + (t[2] + t[3]))
                + ((t[4] + t[5]) + (t[6] + t[7]))
                + a0 * p)

    # ---- RK4; padMethod mutates u0 in place in torch, so later "u0" is p0 --
    p0 = pad(u0)
    f = k_lap(p0)
    acc = f
    f = k_lap(pad(p0 + (0.5 * DT) * f))
    acc = acc + 2.0 * f
    f = k_lap(pad(p0 + (0.5 * DT) * f))
    acc = acc + 2.0 * f
    f = k_lap(pad(p0 + DT * f))
    out_ref[...] = p0 + (DT / 6.0) * (acc + f)


def _pick_bt(Bp, HWp):
    """Batch rows per grid step: biggest block whose ~_LIVE_BUFFERS live
    (bt, HWp) f32 temporaries fit comfortably inside the VMEM limit, while
    leaving >= 2 grid steps (when possible) so the parallel batch axis can be
    sharded across both v7x TensorCores."""
    budget = _VMEM_LIMIT // 2                     # headroom for I/O double-buffers
    cap = budget // (_LIVE_BUFFERS * HWp * 4)
    cap = max(8, cap - cap % 8)
    cap = min(cap, 2048, Bp)
    if Bp >= 16:
        cap = min(cap, Bp // 2)
    for bt in range(cap - cap % 8, 7, -8):
        if Bp % bt == 0:
            return bt
    return 8


def rcnn_cell_forward(h, k):
    """h: (B, C, H, W), k: scalar. Returns (B, 1, H, W) like RCNNCell.forward."""
    B, C, H, W = h.shape
    if H < 3 or W < 3:
        raise NotImplementedError("kernel assumes H >= 3 and W >= 3")
    HW = H * W
    HWp = _round_up(HW, 128)              # lane-dense stores (multiple of 128)
    Bp = _round_up(B, 8)                  # legal (8, 128) sublane blocks
    dtype = jnp.float32                   # TODO(synk): no float64 on TPU Pallas

    u0 = h[:, 0, :, :].astype(dtype).reshape(B, HW)   # u0 = h[:, 0:1, ...]
    if Bp != B or HWp != HW:
        u0 = jnp.pad(u0, ((0, Bp - B), (0, HWp - HW)))

    wts_np, pmask_np = _stencil_consts(H, W, HWp)
    wts = jnp.asarray(wts_np, dtype)      # (8, HWp)
    pmask = jnp.asarray(pmask_np, dtype)  # (4, HWp)
    k_arr = jnp.reshape(jnp.asarray(k, dtype), (1,))

    bt = _pick_bt(Bp, HWp)
    steps = Bp // bt
    # TODO(synk): for very large H*W add an H-tiled (2-row halo) path so a
    # block stays inside v7x's VMEM; a whole field per block is fine here.

    out = pl.pallas_call(
        functools.partial(_rcnn_rk4_kernel, W=W),
        out_shape=jax.ShapeDtypeStruct((Bp, HWp), dtype),
        grid=(steps,),
        in_specs=[
            pl.BlockSpec(memory_space=pltpu.MemorySpace.SMEM),   # k (scalar)
            pl.BlockSpec((8, HWp), lambda b: (0, 0)),            # tap weights
            pl.BlockSpec((4, HWp), lambda b: (0, 0)),            # pad masks
            pl.BlockSpec((bt, HWp), lambda b: (b, 0)),           # field chunk
        ],
        out_specs=pl.BlockSpec((bt, HWp), lambda b: (b, 0)),
        compiler_params=pltpu.CompilerParams(
            dimension_semantics=("parallel",),
            vmem_limit_bytes=_VMEM_LIMIT,
        ),
    )(k_arr, wts, pmask, u0)

    return out[:B, :HW].reshape(B, 1, H, W)


# ---------------------------------------------------------------------------
# Plain-JAX reference (mirrors the PyTorch code, incl. in-place pad semantics)
# ---------------------------------------------------------------------------
def _ref_forward(h, k):
    B, C, H, W = h.shape
    u = h[:, 0:1].astype(jnp.float32)

    def pad(x):
        x = x.at[:, :, :, -1].set(x[:, :, :, -2])
        x = x.at[:, :, :, 0].set(x[:, :, :, 1])
        x = x.at[:, :, 0, :].set(x[:, :, 1, :])
        x = x.at[:, :, -1, :].set(x[:, :, -2, :])
        return x

    def lap(x):
        xp = jnp.pad(x, ((0, 0), (0, 0), (2, 2), (2, 2)))
        out = jnp.zeros_like(x)
        for di, dj, w in LAP5_TAPS:
            out = out + (w / DX ** 2) * xp[:, :, 2 + di:2 + di + H, 2 + dj:2 + dj + W]
        return out

    p0 = pad(u)
    k1 = k * lap(p0)
    u1 = p0 + k1 * (DT / 2.0)
    k2 = k * lap(pad(u1))
    u2 = p0 + k2 * (DT / 2.0)
    k3 = k * lap(pad(u2))
    u3 = p0 + k3 * DT
    k4 = k * lap(pad(u3))
    return p0 + DT * (k1 + 2.0 * k2 + 2.0 * k3 + k4) / 6.0


if __name__ == "__main__":
    key = jax.random.PRNGKey(0)
    k_key, h_key = jax.random.split(key)

    B, C, H, W = 2, 2, 16, 16
    h = jax.random.normal(h_key, (B, C, H, W), dtype=jnp.float32)
    # self.k = Parameter(np.random.rand()) -> a uniform scalar stands in here.
    k = jax.random.uniform(k_key, (), dtype=jnp.float32)

    out = jax.block_until_ready(rcnn_cell_forward(h, k))
    ref = _ref_forward(h, k)

    assert out.shape == (B, 1, H, W), out.shape
    scale = float(jnp.max(jnp.abs(ref))) + 1.0
    max_err = float(jnp.max(jnp.abs(out - ref)))
    assert max_err <= 1e-3 * scale, f"mismatch: max_abs_err={max_err}, scale={scale}"

    print("KERNEL_OK")
</pallas_src>

<mosaic_0001>
module attributes {stable_mosaic.version = 11 : i64} {
  func.func @_rcnn_rk4_kernel(%arg0: i32, %arg1: memref<1xf32, #tpu.memory_space<smem>>, %arg2: memref<8x256xf32, #tpu.memory_space<vmem>>, %arg3: memref<4x256xf32, #tpu.memory_space<vmem>>, %arg4: memref<8x256xf32, #tpu.memory_space<vmem>>, %arg5: memref<8x256xf32, #tpu.memory_space<vmem>>) attributes {dimension_semantics = [#tpu.dimension_semantics<parallel>], iteration_bounds = array<i64: 1>, scalar_prefetch = 0 : i64, scratch_operands = 0 : i64, tpu.core_type = #tpu.core_type<tc>, window_params = [{transform_indices = @transform_0, window_bounds = array<i64: 1>}, {pipeline_mode = #tpu.pipeline_mode<synchronous>, transform_indices = @transform_1, window_bounds = array<i64: 8, 256>}, {pipeline_mode = #tpu.pipeline_mode<synchronous>, transform_indices = @transform_2, window_bounds = array<i64: 4, 256>}, {transform_indices = @transform_3, window_bounds = array<i64: 8, 256>}, {transform_indices = @transform_4, window_bounds = array<i64: 8, 256>}]} {
    %c0 = arith.constant 0 : index
    %c0_0 = arith.constant 0 : index
    %0 = vector.load %arg4[%c0, %c0_0] : memref<8x256xf32, #tpu.memory_space<vmem>>, vector<8x256xf32>
    %c0_1 = arith.constant 0 : index
    %1 = memref.load %arg1[%c0_1] : memref<1xf32, #tpu.memory_space<smem>>
    %c0_2 = arith.constant 0 : index
    %c0_3 = arith.constant 0 : index
    %2 = vector.load %arg3[%c0_2, %c0_3] : memref<4x256xf32, #tpu.memory_space<vmem>>, vector<4x256xf32>
    %cst = arith.constant 0.000000e+00 : f32
    %3 = vector.broadcast %cst : f32 to vector<4x256xf32>
    %4 = arith.cmpf one, %2, %3 : vector<4x256xf32>
    %5 = vector.extract_strided_slice %4 {offsets = [0, 0], sizes = [1, 256], strides = [1, 1]} : vector<4x256xi1> to vector<1x256xi1>
    %6 = vector.extract_strided_slice %4 {offsets = [1, 0], sizes = [1, 256], strides = [1, 1]} : vector<4x256xi1> to vector<1x256xi1>
    %7 = vector.extract_strided_slice %4 {offsets = [2, 0], sizes = [1, 256], strides = [1, 1]} : vector<4x256xi1> to vector<1x256xi1>
    %8 = vector.extract_strided_slice %4 {offsets = [3, 0], sizes = [1, 256], strides = [1, 1]} : vector<4x256xi1> to vector<1x256xi1>
    %c0_4 = arith.constant 0 : index
    %c0_5 = arith.constant 0 : index
    %9 = vector.load %arg2[%c0_4, %c0_5] : memref<8x256xf32, #tpu.memory_space<vmem>>, vector<8x256xf32>
    %10 = vector.broadcast %1 : f32 to vector<8x256xf32>
    %11 = arith.mulf %10, %9 : vector<8x256xf32>
    %12 = vector.extract_strided_slice %11 {offsets = [0, 0], sizes = [1, 256], strides = [1, 1]} : vector<8x256xf32> to vector<1x256xf32>
    %13 = vector.extract_strided_slice %11 {offsets = [1, 0], sizes = [1, 256], strides = [1, 1]} : vector<8x256xf32> to vector<1x256xf32>
    %14 = vector.extract_strided_slice %11 {offsets = [2, 0], sizes = [1, 256], strides = [1, 1]} : vector<8x256xf32> to vector<1x256xf32>
    %15 = vector.extract_strided_slice %11 {offsets = [3, 0], sizes = [1, 256], strides = [1, 1]} : vector<8x256xf32> to vector<1x256xf32>
    %16 = vector.extract_strided_slice %11 {offsets = [4, 0], sizes = [1, 256], strides = [1, 1]} : vector<8x256xf32> to vector<1x256xf32>
    %17 = vector.extract_strided_slice %11 {offsets = [5, 0], sizes = [1, 256], strides = [1, 1]} : vector<8x256xf32> to vector<1x256xf32>
    %18 = vector.extract_strided_slice %11 {offsets = [6, 0], sizes = [1, 256], strides = [1, 1]} : vector<8x256xf32> to vector<1x256xf32>
    %19 = vector.extract_strided_slice %11 {offsets = [7, 0], sizes = [1, 256], strides = [1, 1]} : vector<8x256xf32> to vector<1x256xf32>
    %cst_6 = arith.constant -5.000000e+04 : f32
    %20 = arith.mulf %1, %cst_6 : f32
    %c255_i32 = arith.constant 255 : i32
    %21 = tpu.dynamic_rotate %0 by %c255_i32 dim 1 : vector<8x256xf32>, i32 -> vector<8x256xf32>
    %c1_i32 = arith.constant 1 : i32
    %22 = tpu.dynamic_rotate %0 by %c1_i32 dim 1 : vector<8x256xf32>, i32 -> vector<8x256xf32>
    %23 = vector.shape_cast %5 : vector<1x256xi1> to vector<1x256xi1>
    %24 = vector.broadcast %23 : vector<1x256xi1> to vector<8x256xi1>
    %25 = arith.select %24, %22, %0 : vector<8x256xi1>, vector<8x256xf32>
    %26 = vector.shape_cast %6 : vector<1x256xi1> to vector<1x256xi1>
    %27 = vector.broadcast %26 : vector<1x256xi1> to vector<8x256xi1>
    %28 = arith.select %27, %21, %25 : vector<8x256xi1>, vector<8x256xf32>
    %c240_i32 = arith.constant 240 : i32
    %29 = tpu.dynamic_rotate %28 by %c240_i32 dim 1 : vector<8x256xf32>, i32 -> vector<8x256xf32>
    %c16_i32 = arith.constant 16 : i32
    %30 = tpu.dynamic_rotate %28 by %c16_i32 dim 1 : vector<8x256xf32>, i32 -> vector<8x256xf32>
    %31 = vector.shape_cast %8 : vector<1x256xi1> to vector<1x256xi1>
    %32 = vector.broadcast %31 : vector<1x256xi1> to vector<8x256xi1>
    %33 = arith.select %32, %30, %28 : vector<8x256xi1>, vector<8x256xf32>
    %34 = vector.shape_cast %7 : vector<1x256xi1> to vector<1x256xi1>
    %35 = vector.broadcast %34 : vector<1x256xi1> to vector<8x256xi1>
    %36 = arith.select %35, %29, %33 : vector<8x256xi1>, vector<8x256xf32>
    %c1_i32_7 = arith.constant 1 : i32
    %37 = tpu.dynamic_rotate %36 by %c1_i32_7 dim 1 : vector<8x256xf32>, i32 -> vector<8x256xf32>
    %38 = vector.broadcast %12 : vector<1x256xf32> to vector<8x256xf32>
    %39 = arith.mulf %38, %37 : vector<8x256xf32>
    %c255_i32_8 = arith.constant 255 : i32
    %40 = tpu.dynamic_rotate %36 by %c255_i32_8 dim 1 : vector<8x256xf32>, i32 -> vector<8x256xf32>
    %41 = vector.broadcast %13 : vector<1x256xf32> to vector<8x256xf32>
    %42 = arith.mulf %41, %40 : vector<8x256xf32>
    %c2_i32 = arith.constant 2 : i32
    %43 = tpu.dynamic_rotate %36 by %c2_i32 dim 1 : vector<8x256xf32>, i32 -> vector<8x256xf32>
    %44 = vector.broadcast %14 : vector<1x256xf32> to vector<8x256xf32>
    %45 = arith.mulf %44, %43 : vector<8x256xf32>
    %c254_i32 = arith.constant 254 : i32
    %46 = tpu.dynamic_rotate %36 by %c254_i32 dim 1 : vector<8x256xf32>, i32 -> vector<8x256xf32>
    %47 = vector.broadcast %15 : vector<1x256xf32> to vector<8x256xf32>
    %48 = arith.mulf %47, %46 : vector<8x256xf32>
    %c16_i32_9 = arith.constant 16 : i32
    %49 = tpu.dynamic_rotate %36 by %c16_i32_9 dim 1 : vector<8x256xf32>, i32 -> vector<8x256xf32>
    %50 = vector.broadcast %16 : vector<1x256xf32> to vector<8x256xf32>
    %51 = arith.mulf %50, %49 : vector<8x256xf32>
    %c240_i32_10 = arith.constant 240 : i32
    %52 = tpu.dynamic_rotate %36 by %c240_i32_10 dim 1 : vector<8x256xf32>, i32 -> vector<8x256xf32>
    %53 = vector.broadcast %17 : vector<1x256xf32> to vector<8x256xf32>
    %54 = arith.mulf %53, %52 : vector<8x256xf32>
    %c32_i32 = arith.constant 32 : i32
    %55 = tpu.dynamic_rotate %36 by %c32_i32 dim 1 : vector<8x256xf32>, i32 -> vector<8x256xf32>
    %56 = vector.broadcast %18 : vector<1x256xf32> to vector<8x256xf32>
    %57 = arith.mulf %56, %55 : vector<8x256xf32>
    %c224_i32 = arith.constant 224 : i32
    %58 = tpu.dynamic_rotate %36 by %c224_i32 dim 1 : vector<8x256xf32>, i32 -> vector<8x256xf32>
    %59 = vector.broadcast %19 : vector<1x256xf32> to vector<8x256xf32>
    %60 = arith.mulf %59, %58 : vector<8x256xf32>
    %61 = arith.addf %39, %42 : vector<8x256xf32>
    %62 = arith.addf %45, %48 : vector<8x256xf32>
    %63 = arith.addf %61, %62 : vector<8x256xf32>
    %64 = arith.addf %51, %54 : vector<8x256xf32>
    %65 = arith.addf %57, %60 : vector<8x256xf32>
    %66 = arith.addf %64, %65 : vector<8x256xf32>
    %67 = arith.addf %63, %66 : vector<8x256xf32>
    %68 = vector.broadcast %20 : f32 to vector<8x256xf32>
    %69 = arith.mulf %68, %36 : vector<8x256xf32>
    %70 = arith.addf %67, %69 : vector<8x256xf32>
    %cst_11 = arith.constant 2.500000e-01 : f32
    %71 = vector.broadcast %cst_11 : f32 to vector<8x256xf32>
    %72 = arith.mulf %71, %70 : vector<8x256xf32>
    %73 = arith.addf %36, %72 : vector<8x256xf32>
    %c255_i32_12 = arith.constant 255 : i32
    %74 = tpu.dynamic_rotate %73 by %c255_i32_12 dim 1 : vector<8x256xf32>, i32 -> vector<8x256xf32>
    %c1_i32_13 = arith.constant 1 : i32
    %75 = tpu.dynamic_rotate %73 by %c1_i32_13 dim 1 : vector<8x256xf32>, i32 -> vector<8x256xf32>
    %76 = vector.shape_cast %5 : vector<1x256xi1> to vector<1x256xi1>
    %77 = vector.broadcast %76 : vector<1x256xi1> to vector<8x256xi1>
    %78 = arith.select %77, %75, %73 : vector<8x256xi1>, vector<8x256xf32>
    %79 = vector.shape_cast %6 : vector<1x256xi1> to vector<1x256xi1>
    %80 = vector.broadcast %79 : vector<1x256xi1> to vector<8x256xi1>
    %81 = arith.select %80, %74, %78 : vector<8x256xi1>, vector<8x256xf32>
    %c240_i32_14 = arith.constant 240 : i32
    %82 = tpu.dynamic_rotate %81 by %c240_i32_14 dim 1 : vector<8x256xf32>, i32 -> vector<8x256xf32>
    %c16_i32_15 = arith.constant 16 : i32
    %83 = tpu.dynamic_rotate %81 by %c16_i32_15 dim 1 : vector<8x256xf32>, i32 -> vector<8x256xf32>
    %84 = vector.shape_cast %8 : vector<1x256xi1> to vector<1x256xi1>
    %85 = vector.broadcast %84 : vector<1x256xi1> to vector<8x256xi1>
    %86 = arith.select %85, %83, %81 : vector<8x256xi1>, vector<8x256xf32>
    %87 = vector.shape_cast %7 : vector<1x256xi1> to vector<1x256xi1>
    %88 = vector.broadcast %87 : vector<1x256xi1> to vector<8x256xi1>
    %89 = arith.select %88, %82, %86 : vector<8x256xi1>, vector<8x256xf32>
    %c1_i32_16 = arith.constant 1 : i32
    %90 = tpu.dynamic_rotate %89 by %c1_i32_16 dim 1 : vector<8x256xf32>, i32 -> vector<8x256xf32>
    %91 = vector.broadcast %12 : vector<1x256xf32> to vector<8x256xf32>
    %92 = arith.mulf %91, %90 : vector<8x256xf32>
    %c255_i32_17 = arith.constant 255 : i32
    %93 = tpu.dynamic_rotate %89 by %c255_i32_17 dim 1 : vector<8x256xf32>, i32 -> vector<8x256xf32>
    %94 = vector.broadcast %13 : vector<1x256xf32> to vector<8x256xf32>
    %95 = arith.mulf %94, %93 : vector<8x256xf32>
    %c2_i32_18 = arith.constant 2 : i32
    %96 = tpu.dynamic_rotate %89 by %c2_i32_18 dim 1 : vector<8x256xf32>, i32 -> vector<8x256xf32>
    %97 = vector.broadcast %14 : vector<1x256xf32> to vector<8x256xf32>
    %98 = arith.mulf %97, %96 : vector<8x256xf32>
    %c254_i32_19 = arith.constant 254 : i32
    %99 = tpu.dynamic_rotate %89 by %c254_i32_19 dim 1 : vector<8x256xf32>, i32 -> vector<8x256xf32>
    %100 = vector.broadcast %15 : vector<1x256xf32> to vector<8x256xf32>
    %101 = arith.mulf %100, %99 : vector<8x256xf32>
    %c16_i32_20 = arith.constant 16 : i32
    %102 = tpu.dynamic_rotate %89 by %c16_i32_20 dim 1 : vector<8x256xf32>, i32 -> vector<8x256xf32>
    %103 = vector.broadcast %16 : vector<1x256xf32> to vector<8x256xf32>
    %104 = arith.mulf %103, %102 : vector<8x256xf32>
    %c240_i32_21 = arith.constant 240 : i32
    %105 = tpu.dynamic_rotate %89 by %c240_i32_21 dim 1 : vector<8x256xf32>, i32 -> vector<8x256xf32>
    %106 = vector.broadcast %17 : vector<1x256xf32> to vector<8x256xf32>
    %107 = arith.mulf %106, %105 : vector<8x256xf32>
    %c32_i32_22 = arith.constant 32 : i32
    %108 = tpu.dynamic_rotate %89 by %c32_i32_22 dim 1 : vector<8x256xf32>, i32 -> vector<8x256xf32>
    %109 = vector.broadcast %18 : vector<1x256xf32> to vector<8x256xf32>
    %110 = arith.mulf %109, %108 : vector<8x256xf32>
    %c224_i32_23 = arith.constant 224 : i32
    %111 = tpu.dynamic_rotate %89 by %c224_i32_23 dim 1 : vector<8x256xf32>, i32 -> vector<8x256xf32>
    %112 = vector.broadcast %19 : vector<1x256xf32> to vector<8x256xf32>
    %113 = arith.mulf %112, %111 : vector<8x256xf32>
    %114 = arith.addf %92, %95 : vector<8x256xf32>
    %115 = arith.addf %98, %101 : vector<8x256xf32>
    %116 = arith.addf %114, %115 : vector<8x256xf32>
    %117 = arith.addf %104, %107 : vector<8x256xf32>
    %118 = arith.addf %110, %113 : vector<8x256xf32>
    %119 = arith.addf %117, %118 : vector<8x256xf32>
    %120 = arith.addf %116, %119 : vector<8x256xf32>
    %121 = vector.broadcast %20 : f32 to vector<8x256xf32>
    %122 = arith.mulf %121, %89 : vector<8x256xf32>
    %123 = arith.addf %120, %122 : vector<8x256xf32>
    %cst_24 = arith.constant 2.000000e+00 : f32
    %124 = vector.broadcast %cst_24 : f32 to vector<8x256xf32>
    %125 = arith.mulf %124, %123 : vector<8x256xf32>
    %126 = arith.addf %70, %125 : vector<8x256xf32>
    %cst_25 = arith.constant 2.500000e-01 : f32
    %127 = vector.broadcast %cst_25 : f32 to vector<8x256xf32>
    %128 = arith.mulf %127, %123 : vector<8x256xf32>
    %129 = arith.addf %36, %128 : vector<8x256xf32>
    %c255_i32_26 = arith.constant 255 : i32
    %130 = tpu.dynamic_rotate %129 by %c255_i32_26 dim 1 : vector<8x256xf32>, i32 -> vector<8x256xf32>
    %c1_i32_27 = arith.constant 1 : i32
    %131 = tpu.dynamic_rotate %129 by %c1_i32_27 dim 1 : vector<8x256xf32>, i32 -> vector<8x256xf32>
    %132 = vector.shape_cast %5 : vector<1x256xi1> to vector<1x256xi1>
    %133 = vector.broadcast %132 : vector<1x256xi1> to vector<8x256xi1>
    %134 = arith.select %133, %131, %129 : vector<8x256xi1>, vector<8x256xf32>
    %135 = vector.shape_cast %6 : vector<1x256xi1> to vector<1x256xi1>
    %136 = vector.broadcast %135 : vector<1x256xi1> to vector<8x256xi1>
    %137 = arith.select %136, %130, %134 : vector<8x256xi1>, vector<8x256xf32>
    %c240_i32_28 = arith.constant 240 : i32
    %138 = tpu.dynamic_rotate %137 by %c240_i32_28 dim 1 : vector<8x256xf32>, i32 -> vector<8x256xf32>
    %c16_i32_29 = arith.constant 16 : i32
    %139 = tpu.dynamic_rotate %137 by %c16_i32_29 dim 1 : vector<8x256xf32>, i32 -> vector<8x256xf32>
    %140 = vector.shape_cast %8 : vector<1x256xi1> to vector<1x256xi1>
    %141 = vector.broadcast %140 : vector<1x256xi1> to vector<8x256xi1>
    %142 = arith.select %141, %139, %137 : vector<8x256xi1>, vector<8x256xf32>
    %143 = vector.shape_cast %7 : vector<1x256xi1> to vector<1x256xi1>
    %144 = vector.broadcast %143 : vector<1x256xi1> to vector<8x256xi1>
    %145 = arith.select %144, %138, %142 : vector<8x256xi1>, vector<8x256xf32>
    %c1_i32_30 = arith.constant 1 : i32
    %146 = tpu.dynamic_rotate %145 by %c1_i32_30 dim 1 : vector<8x256xf32>, i32 -> vector<8x256xf32>
    %147 = vector.broadcast %12 : vector<1x256xf32> to vector<8x256xf32>
    %148 = arith.mulf %147, %146 : vector<8x256xf32>
    %c255_i32_31 = arith.constant 255 : i32
    %149 = tpu.dynamic_rotate %145 by %c255_i32_31 dim 1 : vector<8x256xf32>, i32 -> vector<8x256xf32>
    %150 = vector.broadcast %13 : vector<1x256xf32> to vector<8x256xf32>
    %151 = arith.mulf %150, %149 : vector<8x256xf32>
    %c2_i32_32 = arith.constant 2 : i32
    %152 = tpu.dynamic_rotate %145 by %c2_i32_32 dim 1 : vector<8x256xf32>, i32 -> vector<8x256xf32>
    %153 = vector.broadcast %14 : vector<1x256xf32> to vector<8x256xf32>
    %154 = arith.mulf %153, %152 : vector<8x256xf32>
    %c254_i32_33 = arith.constant 254 : i32
    %155 = tpu.dynamic_rotate %145 by %c254_i32_33 dim 1 : vector<8x256xf32>, i32 -> vector<8x256xf32>
    %156 = vector.broadcast %15 : vector<1x256xf32> to vector<8x256xf32>
    %157 = arith.mulf %156, %155 : vector<8x256xf32>
    %c16_i32_34 = arith.constant 16 : i32
    %158 = tpu.dynamic_rotate %145 by %c16_i32_34 dim 1 : vector<8x256xf32>, i32 -> vector<8x256xf32>
    %159 = vector.broadcast %16 : vector<1x256xf32> to vector<8x256xf32>
    %160 = arith.mulf %159, %158 : vector<8x256xf32>
    %c240_i32_35 = arith.constant 240 : i32
    %161 = tpu.dynamic_rotate %145 by %c240_i32_35 dim 1 : vector<8x256xf32>, i32 -> vector<8x256xf32>
    %162 = vector.broadcast %17 : vector<1x256xf32> to vector<8x256xf32>
    %163 = arith.mulf %162, %161 : vector<8x256xf32>
    %c32_i32_36 = arith.constant 32 : i32
    %164 = tpu.dynamic_rotate %145 by %c32_i32_36 dim 1 : vector<8x256xf32>, i32 -> vector<8x256xf32>
    %165 = vector.broadcast %18 : vector<1x256xf32> to vector<8x256xf32>
    %166 = arith.mulf %165, %164 : vector<8x256xf32>
    %c224_i32_37 = arith.constant 224 : i32
    %167 = tpu.dynamic_rotate %145 by %c224_i32_37 dim 1 : vector<8x256xf32>, i32 -> vector<8x256xf32>
    %168 = vector.broadcast %19 : vector<1x256xf32> to vector<8x256xf32>
    %169 = arith.mulf %168, %167 : vector<8x256xf32>
    %170 = arith.addf %148, %151 : vector<8x256xf32>
    %171 = arith.addf %154, %157 : vector<8x256xf32>
    %172 = arith.addf %170, %171 : vector<8x256xf32>
    %173 = arith.addf %160, %163 : vector<8x256xf32>
    %174 = arith.addf %166, %169 : vector<8x256xf32>
    %175 = arith.addf %173, %174 : vector<8x256xf32>
    %176 = arith.addf %172, %175 : vector<8x256xf32>
    %177 = vector.broadcast %20 : f32 to vector<8x256xf32>
    %178 = arith.mulf %177, %145 : vector<8x256xf32>
    %179 = arith.addf %176, %178 : vector<8x256xf32>
    %cst_38 = arith.constant 2.000000e+00 : f32
    %180 = vector.broadcast %cst_38 : f32 to vector<8x256xf32>
    %181 = arith.mulf %180, %179 : vector<8x256xf32>
    %182 = arith.addf %126, %181 : vector<8x256xf32>
    %cst_39 = arith.constant 5.000000e-01 : f32
    %183 = vector.broadcast %cst_39 : f32 to vector<8x256xf32>
    %184 = arith.mulf %183, %179 : vector<8x256xf32>
    %185 = arith.addf %36, %184 : vector<8x256xf32>
    %c255_i32_40 = arith.constant 255 : i32
    %186 = tpu.dynamic_rotate %185 by %c255_i32_40 dim 1 : vector<8x256xf32>, i32 -> vector<8x256xf32>
    %c1_i32_41 = arith.constant 1 : i32
    %187 = tpu.dynamic_rotate %185 by %c1_i32_41 dim 1 : vector<8x256xf32>, i32 -> vector<8x256xf32>
    %188 = vector.shape_cast %5 : vector<1x256xi1> to vector<1x256xi1>
    %189 = vector.broadcast %188 : vector<1x256xi1> to vector<8x256xi1>
    %190 = arith.select %189, %187, %185 : vector<8x256xi1>, vector<8x256xf32>
    %191 = vector.shape_cast %6 : vector<1x256xi1> to vector<1x256xi1>
    %192 = vector.broadcast %191 : vector<1x256xi1> to vector<8x256xi1>
    %193 = arith.select %192, %186, %190 : vector<8x256xi1>, vector<8x256xf32>
    %c240_i32_42 = arith.constant 240 : i32
    %194 = tpu.dynamic_rotate %193 by %c240_i32_42 dim 1 : vector<8x256xf32>, i32 -> vector<8x256xf32>
    %c16_i32_43 = arith.constant 16 : i32
    %195 = tpu.dynamic_rotate %193 by %c16_i32_43 dim 1 : vector<8x256xf32>, i32 -> vector<8x256xf32>
    %196 = vector.shape_cast %8 : vector<1x256xi1> to vector<1x256xi1>
    %197 = vector.broadcast %196 : vector<1x256xi1> to vector<8x256xi1>
    %198 = arith.select %197, %195, %193 : vector<8x256xi1>, vector<8x256xf32>
    %199 = vector.shape_cast %7 : vector<1x256xi1> to vector<1x256xi1>
    %200 = vector.broadcast %199 : vector<1x256xi1> to vector<8x256xi1>
    %201 = arith.select %200, %194, %198 : vector<8x256xi1>, vector<8x256xf32>
    %c1_i32_44 = arith.constant 1 : i32
    %202 = tpu.dynamic_rotate %201 by %c1_i32_44 dim 1 : vector<8x256xf32>, i32 -> vector<8x256xf32>
    %203 = vector.broadcast %12 : vector<1x256xf32> to vector<8x256xf32>
    %204 = arith.mulf %203, %202 : vector<8x256xf32>
    %c255_i32_45 = arith.constant 255 : i32
    %205 = tpu.dynamic_rotate %201 by %c255_i32_45 dim 1 : vector<8x256xf32>, i32 -> vector<8x256xf32>
    %206 = vector.broadcast %13 : vector<1x256xf32> to vector<8x256xf32>
    %207 = arith.mulf %206, %205 : vector<8x256xf32>
    %c2_i32_46 = arith.constant 2 : i32
    %208 = tpu.dynamic_rotate %201 by %c2_i32_46 dim 1 : vector<8x256xf32>, i32 -> vector<8x256xf32>
    %209 = vector.broadcast %14 : vector<1x256xf32> to vector<8x256xf32>
    %210 = arith.mulf %209, %208 : vector<8x256xf32>
    %c254_i32_47 = arith.constant 254 : i32
    %211 = tpu.dynamic_rotate %201 by %c254_i32_47 dim 1 : vector<8x256xf32>, i32 -> vector<8x256xf32>
    %212 = vector.broadcast %15 : vector<1x256xf32> to vector<8x256xf32>
    %213 = arith.mulf %212, %211 : vector<8x256xf32>
    %c16_i32_48 = arith.constant 16 : i32
    %214 = tpu.dynamic_rotate %201 by %c16_i32_48 dim 1 : vector<8x256xf32>, i32 -> vector<8x256xf32>
    %215 = vector.broadcast %16 : vector<1x256xf32> to vector<8x256xf32>
    %216 = arith.mulf %215, %214 : vector<8x256xf32>
    %c240_i32_49 = arith.constant 240 : i32
    %217 = tpu.dynamic_rotate %201 by %c240_i32_49 dim 1 : vector<8x256xf32>, i32 -> vector<8x256xf32>
    %218 = vector.broadcast %17 : vector<1x256xf32> to vector<8x256xf32>
    %219 = arith.mulf %218, %217 : vector<8x256xf32>
    %c32_i32_50 = arith.constant 32 : i32
    %220 = tpu.dynamic_rotate %201 by %c32_i32_50 dim 1 : vector<8x256xf32>, i32 -> vector<8x256xf32>
    %221 = vector.broadcast %18 : vector<1x256xf32> to vector<8x256xf32>
    %222 = arith.mulf %221, %220 : vector<8x256xf32>
    %c224_i32_51 = arith.constant 224 : i32
    %223 = tpu.dynamic_rotate %201 by %c224_i32_51 dim 1 : vector<8x256xf32>, i32 -> vector<8x256xf32>
    %224 = vector.broadcast %19 : vector<1x256xf32> to vector<8x256xf32>
    %225 = arith.mulf %224, %223 : vector<8x256xf32>
    %226 = arith.addf %204, %207 : vector<8x256xf32>
    %227 = arith.addf %210, %213 : vector<8x256xf32>
    %228 = arith.addf %226, %227 : vector<8x256xf32>
    %229 = arith.addf %216, %219 : vector<8x256xf32>
    %230 = arith.addf %222, %225 : vector<8x256xf32>
    %231 = arith.addf %229, %230 : vector<8x256xf32>
    %232 = arith.addf %228, %231 : vector<8x256xf32>
    %233 = vector.broadcast %20 : f32 to vector<8x256xf32>
    %234 = arith.mulf %233, %201 : vector<8x256xf32>
    %235 = arith.addf %232, %234 : vector<8x256xf32>
    %236 = arith.addf %182, %235 : vector<8x256xf32>
    %cst_52 = arith.constant 0.0833333358 : f32
    %237 = vector.broadcast %cst_52 : f32 to vector<8x256xf32>
    %238 = arith.mulf %237, %236 : vector<8x256xf32>
    %239 = arith.addf %36, %238 : vector<8x256xf32>
    %c0_53 = arith.constant 0 : index
    %c0_54 = arith.constant 0 : index
    %240 = vector.load %arg5[%c0_53, %c0_54] : memref<8x256xf32, #tpu.memory_space<vmem>>, vector<8x256xf32>
    tpu.vector_store %arg5[%c0_53, %c0_54], %239 {strides = array<i32>} : memref<8x256xf32, #tpu.memory_space<vmem>>, vector<8x256xf32>,
    return
  }
  func.func @transform_0(%arg0: i32) -> i32 {
    %c0_i32 = arith.constant 0 : i32
    %c0_i32_0 = arith.constant 0 : i32
    return %c0_i32 : i32
  }
  func.func @transform_1(%arg0: i32) -> (i32, i32) {
    %c0_i32 = arith.constant 0 : i32
    %c0_i32_0 = arith.constant 0 : i32
    %c0_i32_1 = arith.constant 0 : i32
    return %c0_i32, %c0_i32_0 : i32, i32
  }
  func.func @transform_2(%arg0: i32) -> (i32, i32) {
    %c0_i32 = arith.constant 0 : i32
    %c0_i32_0 = arith.constant 0 : i32
    %c0_i32_1 = arith.constant 0 : i32
    return %c0_i32, %c0_i32_0 : i32, i32
  }
  func.func @transform_3(%arg0: i32) -> (i32, i32) {
    %c0_i32 = arith.constant 0 : i32
    %c0_i32_0 = arith.constant 0 : i32
    return %arg0, %c0_i32 : i32, i32
  }
  func.func @transform_4(%arg0: i32) -> (i32, i32) {
    %c0_i32 = arith.constant 0 : i32
    %c0_i32_0 = arith.constant 0 : i32
    return %arg0, %c0_i32 : i32, i32
  }
}

</mosaic_0001>

<llo_original>
// kernel: tpu_custom_call.1
$region0: #{tpu_custom_call.1}
  #allocation0 [shape = 'u32[]', space=smem, size = 0x4, offset = 0x4, fixed_abs, tag = 'smem constant byte address 0x4 - core index']
  #allocation1 [shape = 'u32[144,128]{1,0:T(1,128)}', space=vmem, size = 0x12000, scoped, tag = 'internal scratch']
  #allocation2 [shape = 'f32[1]{0:T(128)S(6)}', space=smem, size = 0x200, scoped, tag = 'scoped memory for tpu_custom_call.1']
  %s0 = inlined_call_operand.<no memory space> [shape: f32[1], index: 0, kind: input, shape index: {}]
  %s1 = inlined_call_operand.hbm [shape: f32[8,256], index: 1, kind: input, shape index: {}]
  %s2 = inlined_call_operand.hbm [shape: f32[4,256], index: 2, kind: input, shape index: {}]
  %s3 = inlined_call_operand.hbm [shape: f32[8,256], index: 3, kind: input, shape index: {}]
  %s4 = inlined_call_operand.hbm [shape: f32[8,256], index: 4, kind: output, shape index: {}]
  %s5 = sld [smem:[#allocation0]]
  $region38: #{tpu_custom_call.1} parent=0
    _
  %s7 = ssub.s32 1, %s5
  %s8 = scalar_select 0, %s7, %s5
  %9 = sst [smem:[#allocation2]] %s0
  $region1: #{tpu_custom_call.1} parent=0
    #allocation3 [shape = 'u8[8192]{0}', space=vmem, size = 0x2000, scoped, tag = 'input window, operand 1, single buffered']
    #allocation4 [shape = 's32[1]{0}', space=sflag, size = 0x4, scoped, tag = 'scoped memory for tpu_custom_call.1']
    #allocation5 [shape = 's32[1]{0}', space=sflag, size = 0x4, scoped, tag = 'scoped memory for tpu_custom_call.1']
    #allocation6 [shape = 'u8[4096]{0}', space=vmem, size = 0x1000, scoped, tag = 'input window, operand 2, single buffered']
    #allocation7 [shape = 's32[1]{0}', space=sflag, size = 0x4, scoped, tag = 'scoped memory for tpu_custom_call.1']
    #allocation8 [shape = 'u8[8192]{0}', space=vmem, size = 0x2000, scoped, tag = 'input window, operand 3, single buffered']
    #allocation9 [shape = 'u8[8192]{0}', space=vmem, size = 0x2000, scoped, tag = 'output window, operand 0, single buffered']
    %10 = vsyncpa [#allocation4], 0
    %11 = vsyncpa [#allocation7], 0
    %12 = vsyncpa [#allocation5], 0
    // Predicated region
    $region2: #{tpu_custom_call.1} parent=1 // pred_check
      _
    $region3: #{tpu_custom_call.1} parent=1 // pred_check_branch
      %14 = sbr.rel (0) target = $region5
    $region4: #{tpu_custom_call.1} parent=1 // pred_region
      _
    $region5: #{tpu_custom_call.1} parent=1 // pred_fallthru
      _
    // Predicated region
    $region6: #{tpu_custom_call.1} parent=1 // pred_check
      _
    $region7: #{tpu_custom_call.1} parent=1 // pred_check_branch
      %16 = sbr.rel (0) target = $region9
    $region8: #{tpu_custom_call.1} parent=1 // pred_region
      %s18 = ssub.s32 256, 256
      %19 = vsyncadd [#allocation4], %s18
      %s21 = sshll.u32 [#allocation3], 4
      %s22 = int_to_ptr.vmem [resolvable:$true] %s21
      %24 = dma.hbm_to_vmem [thread:$0]  %s1, 256, %s22, [#allocation4]
    $region9: #{tpu_custom_call.1} parent=1 // pred_fallthru
      _
    // Predicated region
    $region10: #{tpu_custom_call.1} parent=1 // pred_check
      _
    $region11: #{tpu_custom_call.1} parent=1 // pred_check_branch
      %26 = sbr.rel (0) target = $region13
    $region12: #{tpu_custom_call.1} parent=1 // pred_region
      %s28 = ssub.s32 128, 128
      %29 = vsyncadd [#allocation7], %s28
      %s31 = sshll.u32 [#allocation6], 4
      %s32 = int_to_ptr.vmem [resolvable:$true] %s31
      %34 = dma.hbm_to_vmem [thread:$0]  %s2, 128, %s32, [#allocation7]
    $region13: #{tpu_custom_call.1} parent=1 // pred_fallthru
      _
    // Predicated region
    $region14: #{tpu_custom_call.1} parent=1 // pred_check
      _
    $region15: #{tpu_custom_call.1} parent=1 // pred_check_branch
      %36 = sbr.rel (0) target = $region17
    $region16: #{tpu_custom_call.1} parent=1 // pred_region
      %s38 = ssub.s32 256, 256
      %39 = vsyncadd [#allocation7], %s38
      %s41 = sshll.u32 [#allocation8], 4
      %s42 = int_to_ptr.vmem [resolvable:$true] %s41
      %44 = dma.hbm_to_vmem [thread:$0]  %s3, 256, %s42, [#allocation7]
    $region17: #{tpu_custom_call.1} parent=1 // pred_fallthru
      _
    // Predicated region
    $region18: #{tpu_custom_call.1} parent=1 // pred_check
      _
    $region19: #{tpu_custom_call.1} parent=1 // pred_check_branch
      %46 = sbr.rel (0) target = $region21
    $region20: #{tpu_custom_call.1} parent=1 // pred_region
      %47 = dma.done [#allocation4], 256
    $region21: #{tpu_custom_call.1} parent=1 // pred_fallthru
      _
    // Predicated region
    $region22: #{tpu_custom_call.1} parent=1 // pred_check
      _
    $region23: #{tpu_custom_call.1} parent=1 // pred_check_branch
      %49 = sbr.rel (0) target = $region25
    $region24: #{tpu_custom_call.1} parent=1 // pred_region
      %50 = dma.done [#allocation7], 128
    $region25: #{tpu_custom_call.1} parent=1 // pred_fallthru
      _
    // Predicated region
    $region26: #{tpu_custom_call.1} parent=1 // pred_check
      _
    $region27: #{tpu_custom_call.1} parent=1 // pred_check_branch
      %52 = sbr.rel (0) target = $region29
    $region28: #{tpu_custom_call.1} parent=1 // pred_region
      %53 = dma.done [#allocation7], 256
    $region29: #{tpu_custom_call.1} parent=1 // pred_fallthru
      _
    %v54 = vld [vmem:[#allocation8] sm:$0xff]
    %v55 = vld [vmem:[#allocation8 + $0x8] sm:$0xff]
    %s56 = sld [smem:[#allocation2]]
    %v57 = vld [vmem:[#allocation6] sm:$0xff]
    %vm58 = vcmp.ne.f32.partialorder %v57, 0.0
    %v59 = vld [vmem:[#allocation3] sm:$0xff]
    %v60 = vld [vmem:[#allocation3 + $0x8] sm:$0xff]
    %v61 = vstv %s56
    %v62 = vmul.f32 %v61, %v59
    %v63 = vmul.f32 %v61, %v60
    %s64 = smul.f32 %s56, -50000.0
    %65 = vrot.lane.b32.xlu0 %v54, 127
    %v66 = vpop.permute.xlu0 %65
    %67 = vrot.lane.b32.xlu0 %v55, 127
    %v68 = vpop.permute.xlu0 %67
    %v69 = vlaneseq
    %v70 = vand.u32 %v69, 127
    %vm71 = vcmp.lt.s32.totalorder %v70, 127
    %v72 = vsel %vm71, %v66, %v68
    %v73 = vsel %vm71, %v68, %v66
    %74 = vrot.lane.b32.xlu0 %v54, 1
    %v75 = vpop.permute.xlu0 %74
    %76 = vrot.lane.b32.xlu0 %v55, 1
    %v77 = vpop.permute.xlu0 %76
    %vm78 = vcmp.lt.s32.totalorder %v70, 1
    %v79 = vsel %vm78, %v75, %v77
    %v80 = vsel %vm78, %v77, %v75
    %v81 = vsel %vm58, 1, 0
    %vm82 = vcmp.eq.s32.totalorder %v81, 1
    %v85 = vcombine.low %v80, %v79
    %v86 = vcombine.high %v80, %v79
    %v87 = vrot.slane %v85, 1
    %v88 = vrot.slane %v85, 2
    %v89 = vrot.slane %v85, 3
    %v90 = vrot.slane %v86, 1
    %v91 = vrot.slane %v86, 2
    %v92 = vrot.slane %v86, 3
    %v103 = vcombine.low %v54, %v55
    %v104 = vcombine.high %v54, %v55
    %v105 = vrot.slane %v103, 1
    %v106 = vrot.slane %v103, 2
    %v107 = vrot.slane %v103, 3
    %v108 = vrot.slane %v104, 1
    %v109 = vrot.slane %v104, 2
    %v110 = vrot.slane %v104, 3
    %v119 = vsel %vm82, %v85, %v103
    %v120 = vsel %vm82, %v87, %v105
    %v121 = vsel %vm82, %v88, %v106
    %v122 = vsel %vm82, %v89, %v107
    %v123 = vsel %vm82, %v86, %v104
    %v124 = vsel %vm82, %v90, %v108
    %v125 = vsel %vm82, %v91, %v109
    %v126 = vsel %vm82, %v92, %v110
    %v129 = vcombine.low %v72, %v73
    %v130 = vcombine.high %v72, %v73
    %v131 = vrot.slane %v129, 7
    %v132 = vrot.slane %v129, 1
    %v133 = vrot.slane %v129, 2
    %v134 = vrot.slane %v130, 7
    %v135 = vrot.slane %v130, 1
    %v136 = vrot.slane %v130, 2
    %v153 = vrot.slane %v119, 7
    %v154 = vrot.slane %v120, 7
    %v155 = vrot.slane %v121, 7
    %v156 = vrot.slane %v122, 7
    %v157 = vrot.slane %v123, 7
    %v158 = vrot.slane %v124, 7
    %v159 = vrot.slane %v125, 7
    %v160 = vrot.slane %v126, 7
    %v169 = vsel %vm82, %v131, %v153
    %v170 = vsel %vm82, %v129, %v154
    %v171 = vsel %vm82, %v132, %v155
    %v172 = vsel %vm82, %v133, %v156
    %v173 = vsel %vm82, %v134, %v157
    %v174 = vsel %vm82, %v130, %v158
    %v175 = vsel %vm82, %v135, %v159
    %v176 = vsel %vm82, %v136, %v160
    %v185 = vlaneseq
    %v186 = vshrl.u32 %v185, 7
    %v187 = vsub.s32 1, %v186
    %v188 = vrot.slane %v169, %v187
    %v189 = vlaneseq
    %v190 = vshrl.u32 %v189, 7
    %v191 = vsub.s32 5, %v190
    %v192 = vrot.slane %v169, %v191
    %v193 = vlaneseq
    %v194 = vshrl.u32 %v193, 7
    %v195 = vsub.s32 1, %v194
    %v196 = vrot.slane %v170, %v195
    %v197 = vlaneseq
    %v198 = vshrl.u32 %v197, 7
    %v199 = vsub.s32 5, %v198
    %v200 = vrot.slane %v170, %v199
    %v201 = vlaneseq
    %v202 = vshrl.u32 %v201, 7
    %v203 = vsub.s32 1, %v202
    %v204 = vrot.slane %v171, %v203
    %v205 = vlaneseq
    %v206 = vshrl.u32 %v205, 7
    %v207 = vsub.s32 5, %v206
    %v208 = vrot.slane %v171, %v207
    %v209 = vlaneseq
    %v210 = vshrl.u32 %v209, 7
    %v211 = vsub.s32 1, %v210
    %v212 = vrot.slane %v172, %v211
    %v213 = vlaneseq
    %v214 = vshrl.u32 %v213, 7
    %v215 = vsub.s32 5, %v214
    %v216 = vrot.slane %v172, %v215
    %v217 = vlaneseq
    %v218 = vshrl.u32 %v217, 7
    %v219 = vsub.s32 1, %v218
    %v220 = vrot.slane %v173, %v219
    %v221 = vlaneseq
    %v222 = vshrl.u32 %v221, 7
    %v223 = vsub.s32 5, %v222
    %v224 = vrot.slane %v173, %v223
    %v225 = vlaneseq
    %v226 = vshrl.u32 %v225, 7
    %v227 = vsub.s32 1, %v226
    %v228 = vrot.slane %v174, %v227
    %v229 = vlaneseq
    %v230 = vshrl.u32 %v229, 7
    %v231 = vsub.s32 5, %v230
    %v232 = vrot.slane %v174, %v231
    %v233 = vlaneseq
    %v234 = vshrl.u32 %v233, 7
    %v235 = vsub.s32 1, %v234
    %v236 = vrot.slane %v175, %v235
    %v237 = vlaneseq
    %v238 = vshrl.u32 %v237, 7
    %v239 = vsub.s32 5, %v238
    %v240 = vrot.slane %v175, %v239
    %v241 = vlaneseq
    %v242 = vshrl.u32 %v241, 7
    %v243 = vsub.s32 1, %v242
    %v244 = vrot.slane %v176, %v243
    %v245 = vlaneseq
    %v246 = vshrl.u32 %v245, 7
    %v247 = vsub.s32 5, %v246
    %v248 = vrot.slane %v176, %v247
    %vm249 = vcmask 1041409
    %v250 = vsel %vm249, %v196, %v188
    %vm251 = vcmask 1042434
    %v252 = vsel %vm251, %v204, %v250
    %vm253 = vcmask 1043459
    %v254 = vsel %vm253, %v212, %v252
    %vm255 = vcmask 1044484
    %v256 = vsel %vm255, %v220, %v254
    %vm257 = vcmask 1045509
    %v258 = vsel %vm257, %v228, %v256
    %vm259 = vcmask 1046534
    %v260 = vsel %vm259, %v236, %v258
    %vm261 = vcmask 1047559
    %v262 = vsel %vm261, %v244, %v260
    %v263 = vsel %vm249, %v200, %v192
    %v264 = vsel %vm251, %v208, %v263
    %v265 = vsel %vm253, %v216, %v264
    %v266 = vsel %vm255, %v224, %v265
    %v267 = vsel %vm257, %v232, %v266
    %v268 = vsel %vm259, %v240, %v267
    %v269 = vsel %vm261, %v248, %v268
    %272 = vrot.lane.b32.xlu0 %v262, 112
    %v273 = vpop.permute.xlu0 %272
    %274 = vrot.lane.b32.xlu0 %v269, 112
    %v275 = vpop.permute.xlu0 %274
    %vm276 = vcmp.lt.s32.totalorder %v70, 112
    %v277 = vsel %vm276, %v273, %v275
    %v278 = vsel %vm276, %v275, %v273
    %279 = vrot.lane.b32.xlu0 %v262, 16
    %v280 = vpop.permute.xlu0 %279
    %281 = vrot.lane.b32.xlu0 %v269, 16
    %v282 = vpop.permute.xlu0 %281
    %vm283 = vcmp.lt.s32.totalorder %v70, 16
    %v284 = vsel %vm283, %v280, %v282
    %v285 = vsel %vm283, %v282, %v280
    %v288 = vcombine.low %v285, %v284
    %v289 = vcombine.high %v285, %v284
    %v290 = vrot.slane %v288, 5
    %v291 = vrot.slane %v288, 6
    %v292 = vrot.slane %v288, 7
    %v293 = vrot.slane %v289, 5
    %v294 = vrot.slane %v289, 6
    %v295 = vrot.slane %v289, 7
    %v304 = vrot.slane %v169, 6
    %v305 = vrot.slane %v170, 6
    %v306 = vrot.slane %v171, 6
    %v307 = vrot.slane %v172, 6
    %v308 = vrot.slane %v173, 6
    %v309 = vrot.slane %v174, 6
    %v310 = vrot.slane %v175, 6
    %v311 = vrot.slane %v176, 6
    %v320 = vsel %vm82, %v290, %v304
    %v321 = vsel %vm82, %v291, %v305
    %v322 = vsel %vm82, %v292, %v306
    %v323 = vsel %vm82, %v288, %v307
    %v324 = vsel %vm82, %v293, %v308
    %v325 = vsel %vm82, %v294, %v309
    %v326 = vsel %vm82, %v295, %v310
    %v327 = vsel %vm82, %v289, %v311
    %v330 = vcombine.low %v277, %v278
    %v331 = vcombine.high %v277, %v278
    %v332 = vrot.slane %v330, 6
    %v333 = vrot.slane %v330, 7
    %v334 = vrot.slane %v330, 1
    %v335 = vrot.slane %v331, 6
    %v336 = vrot.slane %v331, 7
    %v337 = vrot.slane %v331, 1
    %v354 = vrot.slane %v320, 5
    %v355 = vrot.slane %v354, 4
    %v356 = vrot.slane %v321, 5
    %v357 = vrot.slane %v356, 4
    %v358 = vrot.slane %v322, 5
    %v359 = vrot.slane %v358, 4
    %v360 = vrot.slane %v323, 5
    %v361 = vrot.slane %v360, 4
    %v362 = vrot.slane %v324, 5
    %v363 = vrot.slane %v362, 4
    %v364 = vrot.slane %v325, 5
    %v365 = vrot.slane %v364, 4
    %v366 = vrot.slane %v326, 5
    %v367 = vrot.slane %v366, 4
    %v368 = vrot.slane %v327, 5
    %v369 = vrot.slane %v368, 4
    %v378 = vsel %vm82, %v332, %v355
    %v379 = vsel %vm82, %v333, %v357
    %v380 = vsel %vm82, %v330, %v359
    %v381 = vsel %vm82, %v334, %v361
    %v382 = vsel %vm82, %v335, %v363
    %v383 = vsel %vm82, %v336, %v365
    %v384 = vsel %vm82, %v331, %v367
    %v385 = vsel %vm82, %v337, %v369
    %v394 = vlaneseq
    %v395 = vshrl.u32 %v394, 7
    %v396 = vsub.s32 2, %v395
    %v397 = vrot.slane %v378, %v396
    %v398 = vlaneseq
    %v399 = vshrl.u32 %v398, 7
    %v400 = vsub.s32 6, %v399
    %v401 = vrot.slane %v378, %v400
    %v402 = vlaneseq
    %v403 = vshrl.u32 %v402, 7
    %v404 = vsub.s32 2, %v403
    %v405 = vrot.slane %v379, %v404
    %v406 = vlaneseq
    %v407 = vshrl.u32 %v406, 7
    %v408 = vsub.s32 6, %v407
    %v409 = vrot.slane %v379, %v408
    %v410 = vlaneseq
    %v411 = vshrl.u32 %v410, 7
    %v412 = vsub.s32 2, %v411
    %v413 = vrot.slane %v380, %v412
    %v414 = vlaneseq
    %v415 = vshrl.u32 %v414, 7
    %v416 = vsub.s32 6, %v415
    %v417 = vrot.slane %v380, %v416
    %v418 = vlaneseq
    %v419 = vshrl.u32 %v418, 7
    %v420 = vsub.s32 2, %v419
    %v421 = vrot.slane %v381, %v420
    %v422 = vlaneseq
    %v423 = vshrl.u32 %v422, 7
    %v424 = vsub.s32 6, %v423
    %v425 = vrot.slane %v381, %v424
    %v426 = vlaneseq
    %v427 = vshrl.u32 %v426, 7
    %v428 = vsub.s32 2, %v427
    %v429 = vrot.slane %v382, %v428
    %v430 = vlaneseq
    %v431 = vshrl.u32 %v430, 7
    %v432 = vsub.s32 6, %v431
    %v433 = vrot.slane %v382, %v432
    %v434 = vlaneseq
    %v435 = vshrl.u32 %v434, 7
    %v436 = vsub.s32 2, %v435
    %v437 = vrot.slane %v383, %v436
    %v438 = vlaneseq
    %v439 = vshrl.u32 %v438, 7
    %v440 = vsub.s32 6, %v439
    %v441 = vrot.slane %v383, %v440
    %v442 = vlaneseq
    %v443 = vshrl.u32 %v442, 7
    %v444 = vsub.s32 2, %v443
    %v445 = vrot.slane %v384, %v444
    %v446 = vlaneseq
    %v447 = vshrl.u32 %v446, 7
    %v448 = vsub.s32 6, %v447
    %v449 = vrot.slane %v384, %v448
    %v450 = vlaneseq
    %v451 = vshrl.u32 %v450, 7
    %v452 = vsub.s32 2, %v451
    %v453 = vrot.slane %v385, %v452
    %v454 = vlaneseq
    %v455 = vshrl.u32 %v454, 7
    %v456 = vsub.s32 6, %v455
    %v457 = vrot.slane %v385, %v456
    %v458 = vsel %vm249, %v405, %v397
    %v459 = vsel %vm251, %v413, %v458
    %v460 = vsel %vm253, %v421, %v459
    %v461 = vsel %vm255, %v429, %v460
    %v462 = vsel %vm257, %v437, %v461
    %v463 = vsel %vm259, %v445, %v462
    %v464 = vsel %vm261, %v453, %v463
    %v465 = vsel %vm249, %v409, %v401
    %v466 = vsel %vm251, %v417, %v465
    %v467 = vsel %vm253, %v425, %v466
    %v468 = vsel %vm255, %v433, %v467
    %v469 = vsel %vm257, %v441, %v468
    %v470 = vsel %vm259, %v449, %v469
    %v471 = vsel %vm261, %v457, %v470
    %474 = vrot.lane.b32.xlu0 %v464, 1
    %v475 = vpop.permute.xlu0 %474
    %476 = vrot.lane.b32.xlu0 %v471, 1
    %v477 = vpop.permute.xlu0 %476
    %v478 = vsel %vm78, %v475, %v477
    %v479 = vsel %vm78, %v477, %v475
    %v480 = vlaneseq
    %v481 = vshrl.u32 %v480, 7
    %v482 = vsub.s32 0, %v481
    %v483 = vrot.slane %v62, %v482
    %v484 = vlaneseq
    %v485 = vshrl.u32 %v484, 7
    %v486 = vsub.s32 0, %v485
    %v487 = vrot.slane %v63, %v486
    %v488 = vmul.f32 %v483, %v479
    %v489 = vmul.f32 %v487, %v478
    %490 = vrot.lane.b32.xlu0 %v464, 127
    %v491 = vpop.permute.xlu0 %490
    %492 = vrot.lane.b32.xlu0 %v471, 127
    %v493 = vpop.permute.xlu0 %492
    %v494 = vsel %vm71, %v491, %v493
    %v495 = vsel %vm71, %v493, %v491
    %v496 = vlaneseq
    %v497 = vshrl.u32 %v496, 7
    %v498 = vsub.s32 1, %v497
    %v499 = vrot.slane %v62, %v498
    %v500 = vlaneseq
    %v501 = vshrl.u32 %v500, 7
    %v502 = vsub.s32 1, %v501
    %v503 = vrot.slane %v63, %v502
    %v504 = vmul.f32 %v499, %v494
    %v505 = vmul.f32 %v503, %v495
    %506 = vrot.lane.b32.xlu0 %v464, 2
    %v507 = vpop.permute.xlu0 %506
    %508 = vrot.lane.b32.xlu0 %v471, 2
    %v509 = vpop.permute.xlu0 %508
    %vm510 = vcmp.lt.s32.totalorder %v70, 2
    %v511 = vsel %vm510, %v507, %v509
    %v512 = vsel %vm510, %v509, %v507
    %v513 = vlaneseq
    %v514 = vshrl.u32 %v513, 7
    %v515 = vsub.s32 2, %v514
    %v516 = vrot.slane %v62, %v515
    %v517 = vlaneseq
    %v518 = vshrl.u32 %v517, 7
    %v519 = vsub.s32 2, %v518
    %v520 = vrot.slane %v63, %v519
    %v521 = vmul.f32 %v516, %v512
    %v522 = vmul.f32 %v520, %v511
    %523 = vrot.lane.b32.xlu0 %v464, 126
    %v524 = vpop.permute.xlu0 %523
    %525 = vrot.lane.b32.xlu0 %v471, 126
    %v526 = vpop.permute.xlu0 %525
    %vm527 = vcmp.lt.s32.totalorder %v70, 126
    %v528 = vsel %vm527, %v524, %v526
    %v529 = vsel %vm527, %v526, %v524
    %v530 = vlaneseq
    %v531 = vshrl.u32 %v530, 7
    %v532 = vsub.s32 3, %v531
    %v533 = vrot.slane %v62, %v532
    %v534 = vlaneseq
    %v535 = vshrl.u32 %v534, 7
    %v536 = vsub.s32 3, %v535
    %v537 = vrot.slane %v63, %v536
    %v538 = vmul.f32 %v533, %v528
    %v539 = vmul.f32 %v537, %v529
    %540 = vrot.lane.b32.xlu0 %v464, 16
    %v541 = vpop.permute.xlu0 %540
    %542 = vrot.lane.b32.xlu0 %v471, 16
    %v543 = vpop.permute.xlu0 %542
    %v544 = vsel %vm283, %v541, %v543
    %v545 = vsel %vm283, %v543, %v541
    %v546 = vlaneseq
    %v547 = vshrl.u32 %v546, 7
    %v548 = vsub.s32 4, %v547
    %v549 = vrot.slane %v62, %v548
    %v550 = vlaneseq
    %v551 = vshrl.u32 %v550, 7
    %v552 = vsub.s32 4, %v551
    %v553 = vrot.slane %v63, %v552
    %v554 = vmul.f32 %v549, %v545
    %v555 = vmul.f32 %v553, %v544
    %556 = vrot.lane.b32.xlu0 %v464, 112
    %v557 = vpop.permute.xlu0 %556
    %558 = vrot.lane.b32.xlu0 %v471, 112
    %v559 = vpop.permute.xlu0 %558
    %v560 = vsel %vm276, %v557, %v559
    %v561 = vsel %vm276, %v559, %v557
    %v562 = vlaneseq
    %v563 = vshrl.u32 %v562, 7
    %v564 = vsub.s32 5, %v563
    %v565 = vrot.slane %v62, %v564
    %v566 = vlaneseq
    %v567 = vshrl.u32 %v566, 7
    %v568 = vsub.s32 5, %v567
    %v569 = vrot.slane %v63, %v568
    %v570 = vmul.f32 %v565, %v560
    %v571 = vmul.f32 %v569, %v561
    %572 = vrot.lane.b32.xlu0 %v464, 32
    %v573 = vpop.permute.xlu0 %572
    %574 = vrot.lane.b32.xlu0 %v471, 32
    %v575 = vpop.permute.xlu0 %574
    %vm576 = vcmp.lt.s32.totalorder %v70, 32
    %v577 = vsel %vm576, %v573, %v575
    %v578 = vsel %vm576, %v575, %v573
    %v579 = vlaneseq
    %v580 = vshrl.u32 %v579, 7
    %v581 = vsub.s32 6, %v580
    %v582 = vrot.slane %v62, %v581
    %v583 = vlaneseq
    %v584 = vshrl.u32 %v583, 7
    %v585 = vsub.s32 6, %v584
    %v586 = vrot.slane %v63, %v585
    %v587 = vmul.f32 %v582, %v578
    %v588 = vmul.f32 %v586, %v577
    %589 = vrot.lane.b32.xlu0 %v464, 96
    %v590 = vpop.permute.xlu0 %589
    %591 = vrot.lane.b32.xlu0 %v471, 96
    %v592 = vpop.permute.xlu0 %591
    %vm593 = vcmp.lt.s32.totalorder %v70, 96
    %v594 = vsel %vm593, %v590, %v592
    %v595 = vsel %vm593, %v592, %v590
    %v596 = vlaneseq
    %v597 = vshrl.u32 %v596, 7
    %v598 = vsub.s32 7, %v597
    %v599 = vrot.slane %v62, %v598
    %v600 = vlaneseq
    %v601 = vshrl.u32 %v600, 7
    %v602 = vsub.s32 7, %v601
    %v603 = vrot.slane %v63, %v602
    %v604 = vmul.f32 %v599, %v594
    %v605 = vmul.f32 %v603, %v595
    %v606 = vadd.f32 %v488, %v504
    %v607 = vadd.f32 %v489, %v505
    %v608 = vadd.f32 %v521, %v538
    %v609 = vadd.f32 %v522, %v539
    %v610 = vadd.f32 %v606, %v608
    %v611 = vadd.f32 %v607, %v609
    %v612 = vadd.f32 %v554, %v570
    %v613 = vadd.f32 %v555, %v571
    %v614 = vadd.f32 %v587, %v604
    %v615 = vadd.f32 %v588, %v605
    %v616 = vadd.f32 %v612, %v614
    %v617 = vadd.f32 %v613, %v615
    %v618 = vadd.f32 %v610, %v616
    %v619 = vadd.f32 %v611, %v617
    %v620 = vstv %s64
    %v621 = vmul.f32 %v620, %v378
    %v622 = vmul.f32 %v620, %v379
    %v623 = vmul.f32 %v620, %v380
    %v624 = vmul.f32 %v620, %v381
    %v625 = vmul.f32 %v620, %v382
    %v626 = vmul.f32 %v620, %v383
    %v627 = vmul.f32 %v620, %v384
    %v628 = vmul.f32 %v620, %v385
    %v637 = vlaneseq
    %v638 = vshrl.u32 %v637, 7
    %v639 = vsub.s32 2, %v638
    %v640 = vrot.slane %v621, %v639
    %v641 = vlaneseq
    %v642 = vshrl.u32 %v641, 7
    %v643 = vsub.s32 6, %v642
    %v644 = vrot.slane %v621, %v643
    %v645 = vlaneseq
    %v646 = vshrl.u32 %v645, 7
    %v647 = vsub.s32 2, %v646
    %v648 = vrot.slane %v622, %v647
    %v649 = vlaneseq
    %v650 = vshrl.u32 %v649, 7
    %v651 = vsub.s32 6, %v650
    %v652 = vrot.slane %v622, %v651
    %v653 = vlaneseq
    %v654 = vshrl.u32 %v653, 7
    %v655 = vsub.s32 2, %v654
    %v656 = vrot.slane %v623, %v655
    %v657 = vlaneseq
    %v658 = vshrl.u32 %v657, 7
    %v659 = vsub.s32 6, %v658
    %v660 = vrot.slane %v623, %v659
    %v661 = vlaneseq
    %v662 = vshrl.u32 %v661, 7
    %v663 = vsub.s32 2, %v662
    %v664 = vrot.slane %v624, %v663
    %v665 = vlaneseq
    %v666 = vshrl.u32 %v665, 7
    %v667 = vsub.s32 6, %v666
    %v668 = vrot.slane %v624, %v667
    %v669 = vlaneseq
    %v670 = vshrl.u32 %v669, 7
    %v671 = vsub.s32 2, %v670
    %v672 = vrot.slane %v625, %v671
    %v673 = vlaneseq
    %v674 = vshrl.u32 %v673, 7
    %v675 = vsub.s32 6, %v674
    %v676 = vrot.slane %v625, %v675
    %v677 = vlaneseq
    %v678 = vshrl.u32 %v677, 7
    %v679 = vsub.s32 2, %v678
    %v680 = vrot.slane %v626, %v679
    %v681 = vlaneseq
    %v682 = vshrl.u32 %v681, 7
    %v683 = vsub.s32 6, %v682
    %v684 = vrot.slane %v626, %v683
    %v685 = vlaneseq
    %v686 = vshrl.u32 %v685, 7
    %v687 = vsub.s32 2, %v686
    %v688 = vrot.slane %v627, %v687
    %v689 = vlaneseq
    %v690 = vshrl.u32 %v689, 7
    %v691 = vsub.s32 6, %v690
    %v692 = vrot.slane %v627, %v691
    %v693 = vlaneseq
    %v694 = vshrl.u32 %v693, 7
    %v695 = vsub.s32 2, %v694
    %v696 = vrot.slane %v628, %v695
    %v697 = vlaneseq
    %v698 = vshrl.u32 %v697, 7
    %v699 = vsub.s32 6, %v698
    %v700 = vrot.slane %v628, %v699
    %v701 = vsel %vm249, %v648, %v640
    %v702 = vsel %vm251, %v656, %v701
    %v703 = vsel %vm253, %v664, %v702
    %v704 = vsel %vm255, %v672, %v703
    %v705 = vsel %vm257, %v680, %v704
    %v706 = vsel %vm259, %v688, %v705
    %v707 = vsel %vm261, %v696, %v706
    %v708 = vsel %vm249, %v652, %v644
    %v709 = vsel %vm251, %v660, %v708
    %v710 = vsel %vm253, %v668, %v709
    %v711 = vsel %vm255, %v676, %v710
    %v712 = vsel %vm257, %v684, %v711
    %v713 = vsel %vm259, %v692, %v712
    %v714 = vsel %vm261, %v700, %v713
    %v717 = vadd.f32 %v618, %v707
    %v718 = vadd.f32 %v619, %v714
    %v719 = vmul.f32 %v717, 0.25
    %v720 = vmul.f32 %v718, 0.25
    %v723 = vcombine.low %v719, %v720
    %v724 = vcombine.high %v719, %v720
    %v725 = vrot.slane %v723, 6
    %v726 = vrot.slane %v723, 7
    %v727 = vrot.slane %v723, 1
    %v728 = vrot.slane %v724, 6
    %v729 = vrot.slane %v724, 7
    %v730 = vrot.slane %v724, 1
    %v739 = vadd.f32 %v378, %v725
    %v740 = vadd.f32 %v379, %v726
    %v741 = vadd.f32 %v380, %v723
    %v742 = vadd.f32 %v381, %v727
    %v743 = vadd.f32 %v382, %v728
    %v744 = vadd.f32 %v383, %v729
    %v745 = vadd.f32 %v384, %v724
    %v746 = vadd.f32 %v385, %v730
    %v755 = vlaneseq
    %v756 = vshrl.u32 %v755, 7
    %v757 = vsub.s32 2, %v756
    %v758 = vrot.slane %v739, %v757
    %v759 = vlaneseq
    %v760 = vshrl.u32 %v759, 7
    %v761 = vsub.s32 6, %v760
    %v762 = vrot.slane %v739, %v761
    %v763 = vlaneseq
    %v764 = vshrl.u32 %v763, 7
    %v765 = vsub.s32 2, %v764
    %v766 = vrot.slane %v740, %v765
    %v767 = vlaneseq
    %v768 = vshrl.u32 %v767, 7
    %v769 = vsub.s32 6, %v768
    %v770 = vrot.slane %v740, %v769
    %v771 = vlaneseq
    %v772 = vshrl.u32 %v771, 7
    %v773 = vsub.s32 2, %v772
    %v774 = vrot.slane %v741, %v773
    %v775 = vlaneseq
    %v776 = vshrl.u32 %v775, 7
    %v777 = vsub.s32 6, %v776
    %v778 = vrot.slane %v741, %v777
    %v779 = vlaneseq
    %v780 = vshrl.u32 %v779, 7
    %v781 = vsub.s32 2, %v780
    %v782 = vrot.slane %v742, %v781
    %v783 = vlaneseq
    %v784 = vshrl.u32 %v783, 7
    %v785 = vsub.s32 6, %v784
    %v786 = vrot.slane %v742, %v785
    %v787 = vlaneseq
    %v788 = vshrl.u32 %v787, 7
    %v789 = vsub.s32 2, %v788
    %v790 = vrot.slane %v743, %v789
    %v791 = vlaneseq
    %v792 = vshrl.u32 %v791, 7
    %v793 = vsub.s32 6, %v792
    %v794 = vrot.slane %v743, %v793
    %v795 = vlaneseq
    %v796 = vshrl.u32 %v795, 7
    %v797 = vsub.s32 2, %v796
    %v798 = vrot.slane %v744, %v797
    %v799 = vlaneseq
    %v800 = vshrl.u32 %v799, 7
    %v801 = vsub.s32 6, %v800
    %v802 = vrot.slane %v744, %v801
    %v803 = vlaneseq
    %v804 = vshrl.u32 %v803, 7
    %v805 = vsub.s32 2, %v804
    %v806 = vrot.slane %v745, %v805
    %v807 = vlaneseq
    %v808 = vshrl.u32 %v807, 7
    %v809 = vsub.s32 6, %v808
    %v810 = vrot.slane %v745, %v809
    %v811 = vlaneseq
    %v812 = vshrl.u32 %v811, 7
    %v813 = vsub.s32 2, %v812
    %v814 = vrot.slane %v746, %v813
    %v815 = vlaneseq
    %v816 = vshrl.u32 %v815, 7
    %v817 = vsub.s32 6, %v816
    %v818 = vrot.slane %v746, %v817
    %v819 = vsel %vm249, %v766, %v758
    %v820 = vsel %vm251, %v774, %v819
    %v821 = vsel %vm253, %v782, %v820
    %v822 = vsel %vm255, %v790, %v821
    %v823 = vsel %vm257, %v798, %v822
    %v824 = vsel %vm259, %v806, %v823
    %v825 = vsel %vm261, %v814, %v824
    %v826 = vsel %vm249, %v770, %v762
    %v827 = vsel %vm251, %v778, %v826
    %v828 = vsel %vm253, %v786, %v827
    %v829 = vsel %vm255, %v794, %v828
    %v830 = vsel %vm257, %v802, %v829
    %v831 = vsel %vm259, %v810, %v830
    %v832 = vsel %vm261, %v818, %v831
    %835 = vrot.lane.b32.xlu0 %v825, 127
    %v836 = vpop.permute.xlu0 %835
    %837 = vrot.lane.b32.xlu0 %v832, 127
    %v838 = vpop.permute.xlu0 %837
    %v839 = vsel %vm71, %v836, %v838
    %v840 = vsel %vm71, %v838, %v836
    %841 = vrot.lane.b32.xlu0 %v825, 1
    %v842 = vpop.permute.xlu0 %841
    %843 = vrot.lane.b32.xlu0 %v832, 1
    %v844 = vpop.permute.xlu0 %843
    %v845 = vsel %vm78, %v842, %v844
    %v846 = vsel %vm78, %v844, %v842
    %v849 = vcombine.low %v846, %v845
    %v850 = vcombine.high %v846, %v845
    %v851 = vrot.slane %v849, 1
    %v852 = vrot.slane %v849, 2
    %v853 = vrot.slane %v849, 3
    %v854 = vrot.slane %v850, 1
    %v855 = vrot.slane %v850, 2
    %v856 = vrot.slane %v850, 3
    %v865 = vrot.slane %v739, 6
    %v866 = vrot.slane %v865, 4
    %v867 = vrot.slane %v740, 6
    %v868 = vrot.slane %v867, 4
    %v869 = vrot.slane %v741, 6
    %v870 = vrot.slane %v869, 4
    %v871 = vrot.slane %v742, 6
    %v872 = vrot.slane %v871, 4
    %v873 = vrot.slane %v743, 6
    %v874 = vrot.slane %v873, 4
    %v875 = vrot.slane %v744, 6
    %v876 = vrot.slane %v875, 4
    %v877 = vrot.slane %v745, 6
    %v878 = vrot.slane %v877, 4
    %v879 = vrot.slane %v746, 6
    %v880 = vrot.slane %v879, 4
    %v889 = vsel %vm82, %v849, %v866
    %v890 = vsel %vm82, %v851, %v868
    %v891 = vsel %vm82, %v852, %v870
    %v892 = vsel %vm82, %v853, %v872
    %v893 = vsel %vm82, %v850, %v874
    %v894 = vsel %vm82, %v854, %v876
    %v895 = vsel %vm82, %v855, %v878
    %v896 = vsel %vm82, %v856, %v880
    %v899 = vcombine.low %v839, %v840
    %v900 = vcombine.high %v839, %v840
    %v901 = vrot.slane %v899, 7
    %v902 = vrot.slane %v899, 1
    %v903 = vrot.slane %v899, 2
    %v904 = vrot.slane %v900, 7
    %v905 = vrot.slane %v900, 1
    %v906 = vrot.slane %v900, 2
    %v923 = vrot.slane %v889, 7
    %v924 = vrot.slane %v890, 7
    %v925 = vrot.slane %v891, 7
    %v926 = vrot.slane %v892, 7
    %v927 = vrot.slane %v893, 7
    %v928 = vrot.slane %v894, 7
    %v929 = vrot.slane %v895, 7
    %v930 = vrot.slane %v896, 7
    %v939 = vsel %vm82, %v901, %v923
    %v940 = vsel %vm82, %v899, %v924
    %v941 = vsel %vm82, %v902, %v925
    %v942 = vsel %vm82, %v903, %v926
    %v943 = vsel %vm82, %v904, %v927
    %v944 = vsel %vm82, %v900, %v928
    %v945 = vsel %vm82, %v905, %v929
    %v946 = vsel %vm82, %v906, %v930
    %v955 = vlaneseq
    %v956 = vshrl.u32 %v955, 7
    %v957 = vsub.s32 1, %v956
    %v958 = vrot.slane %v939, %v957
    %v959 = vlaneseq
    %v960 = vshrl.u32 %v959, 7
    %v961 = vsub.s32 5, %v960
    %v962 = vrot.slane %v939, %v961
    %v963 = vlaneseq
    %v964 = vshrl.u32 %v963, 7
    %v965 = vsub.s32 1, %v964
    %v966 = vrot.slane %v940, %v965
    %v967 = vlaneseq
    %v968 = vshrl.u32 %v967, 7
    %v969 = vsub.s32 5, %v968
    %v970 = vrot.slane %v940, %v969
    %v971 = vlaneseq
    %v972 = vshrl.u32 %v971, 7
    %v973 = vsub.s32 1, %v972
    %v974 = vrot.slane %v941, %v973
    %v975 = vlaneseq
    %v976 = vshrl.u32 %v975, 7
    %v977 = vsub.s32 5, %v976
    %v978 = vrot.slane %v941, %v977
    %v979 = vlaneseq
    %v980 = vshrl.u32 %v979, 7
    %v981 = vsub.s32 1, %v980
    %v982 = vrot.slane %v942, %v981
    %v983 = vlaneseq
    %v984 = vshrl.u32 %v983, 7
    %v985 = vsub.s32 5, %v984
    %v986 = vrot.slane %v942, %v985
    %v987 = vlaneseq
    %v988 = vshrl.u32 %v987, 7
    %v989 = vsub.s32 1, %v988
    %v990 = vrot.slane %v943, %v989
    %v991 = vlaneseq
    %v992 = vshrl.u32 %v991, 7
    %v993 = vsub.s32 5, %v992
    %v994 = vrot.slane %v943, %v993
    %v995 = vlaneseq
    %v996 = vshrl.u32 %v995, 7
    %v997 = vsub.s32 1, %v996
    %v998 = vrot.slane %v944, %v997
    %v999 = vlaneseq
    %v1000 = vshrl.u32 %v999, 7
    %v1001 = vsub.s32 5, %v1000
    %v1002 = vrot.slane %v944, %v1001
    %v1003 = vlaneseq
    %v1004 = vshrl.u32 %v1003, 7
    %v1005 = vsub.s32 1, %v1004
    %v1006 = vrot.slane %v945, %v1005
    %v1007 = vlaneseq
    %v1008 = vshrl.u32 %v1007, 7
    %v1009 = vsub.s32 5, %v1008
    %v1010 = vrot.slane %v945, %v1009
    %v1011 = vlaneseq
    %v1012 = vshrl.u32 %v1011, 7
    %v1013 = vsub.s32 1, %v1012
    %v1014 = vrot.slane %v946, %v1013
    %v1015 = vlaneseq
    %v1016 = vshrl.u32 %v1015, 7
    %v1017 = vsub.s32 5, %v1016
    %v1018 = vrot.slane %v946, %v1017
    %v1019 = vsel %vm249, %v966, %v958
    %v1020 = vsel %vm251, %v974, %v1019
    %v1021 = vsel %vm253, %v982, %v1020
    %v1022 = vsel %vm255, %v990, %v1021
    %v1023 = vsel %vm257, %v998, %v1022
    %v1024 = vsel %vm259, %v1006, %v1023
    %v1025 = vsel %vm261, %v1014, %v1024
    %v1026 = vsel %vm249, %v970, %v962
    %v1027 = vsel %vm251, %v978, %v1026
    %v1028 = vsel %vm253, %v986, %v1027
    %v1029 = vsel %vm255, %v994, %v1028
    %v1030 = vsel %vm257, %v1002, %v1029
    %v1031 = vsel %vm259, %v1010, %v1030
    %v1032 = vsel %vm261, %v1018, %v1031
    %1035 = vrot.lane.b32.xlu0 %v1025, 112
    %v1036 = vpop.permute.xlu0 %1035
    %1037 = vrot.lane.b32.xlu0 %v1032, 112
    %v1038 = vpop.permute.xlu0 %1037
    %v1039 = vsel %vm276, %v1036, %v1038
    %v1040 = vsel %vm276, %v1038, %v1036
    %1041 = vrot.lane.b32.xlu0 %v1025, 16
    %v1042 = vpop.permute.xlu0 %1041
    %1043 = vrot.lane.b32.xlu0 %v1032, 16
    %v1044 = vpop.permute.xlu0 %1043
    %v1045 = vsel %vm283, %v1042, %v1044
    %v1046 = vsel %vm283, %v1044, %v1042
    %v1049 = vcombine.low %v1046, %v1045
    %v1050 = vcombine.high %v1046, %v1045
    %v1051 = vrot.slane %v1049, 5
    %v1052 = vrot.slane %v1049, 6
    %v1053 = vrot.slane %v1049, 7
    %v1054 = vrot.slane %v1050, 5
    %v1055 = vrot.slane %v1050, 6
    %v1056 = vrot.slane %v1050, 7
    %v1065 = vrot.slane %v939, 6
    %v1066 = vrot.slane %v940, 6
    %v1067 = vrot.slane %v941, 6
    %v1068 = vrot.slane %v942, 6
    %v1069 = vrot.slane %v943, 6
    %v1070 = vrot.slane %v944, 6
    %v1071 = vrot.slane %v945, 6
    %v1072 = vrot.slane %v946, 6
    %v1081 = vsel %vm82, %v1051, %v1065
    %v1082 = vsel %vm82, %v1052, %v1066
    %v1083 = vsel %vm82, %v1053, %v1067
    %v1084 = vsel %vm82, %v1049, %v1068
    %v1085 = vsel %vm82, %v1054, %v1069
    %v1086 = vsel %vm82, %v1055, %v1070
    %v1087 = vsel %vm82, %v1056, %v1071
    %v1088 = vsel %vm82, %v1050, %v1072
    %v1091 = vcombine.low %v1039, %v1040
    %v1092 = vcombine.high %v1039, %v1040
    %v1093 = vrot.slane %v1091, 6
    %v1094 = vrot.slane %v1091, 7
    %v1095 = vrot.slane %v1091, 1
    %v1096 = vrot.slane %v1092, 6
    %v1097 = vrot.slane %v1092, 7
    %v1098 = vrot.slane %v1092, 1
    %v1115 = vrot.slane %v1081, 5
    %v1116 = vrot.slane %v1115, 4
    %v1117 = vrot.slane %v1082, 5
    %v1118 = vrot.slane %v1117, 4
    %v1119 = vrot.slane %v1083, 5
    %v1120 = vrot.slane %v1119, 4
    %v1121 = vrot.slane %v1084, 5
    %v1122 = vrot.slane %v1121, 4
    %v1123 = vrot.slane %v1085, 5
    %v1124 = vrot.slane %v1123, 4
    %v1125 = vrot.slane %v1086, 5
    %v1126 = vrot.slane %v1125, 4
    %v1127 = vrot.slane %v1087, 5
    %v1128 = vrot.slane %v1127, 4
    %v1129 = vrot.slane %v1088, 5
    %v1130 = vrot.slane %v1129, 4
    %v1139 = vsel %vm82, %v1093, %v1116
    %v1140 = vsel %vm82, %v1094, %v1118
    %v1141 = vsel %vm82, %v1091, %v1120
    %v1142 = vsel %vm82, %v1095, %v1122
    %v1143 = vsel %vm82, %v1096, %v1124
    %v1144 = vsel %vm82, %v1097, %v1126
    %v1145 = vsel %vm82, %v1092, %v1128
    %v1146 = vsel %vm82, %v1098, %v1130
    %v1155 = vlaneseq
    %v1156 = vshrl.u32 %v1155, 7
    %v1157 = vsub.s32 2, %v1156
    %v1158 = vrot.slane %v1139, %v1157
    %v1159 = vlaneseq
    %v1160 = vshrl.u32 %v1159, 7
    %v1161 = vsub.s32 6, %v1160
    %v1162 = vrot.slane %v1139, %v1161
    %v1163 = vlaneseq
    %v1164 = vshrl.u32 %v1163, 7
    %v1165 = vsub.s32 2, %v1164
    %v1166 = vrot.slane %v1140, %v1165
    %v1167 = vlaneseq
    %v1168 = vshrl.u32 %v1167, 7
    %v1169 = vsub.s32 6, %v1168
    %v1170 = vrot.slane %v1140, %v1169
    %v1171 = vlaneseq
    %v1172 = vshrl.u32 %v1171, 7
    %v1173 = vsub.s32 2, %v1172
    %v1174 = vrot.slane %v1141, %v1173
    %v1175 = vlaneseq
    %v1176 = vshrl.u32 %v1175, 7
    %v1177 = vsub.s32 6, %v1176
    %v1178 = vrot.slane %v1141, %v1177
    %v1179 = vlaneseq
    %v1180 = vshrl.u32 %v1179, 7
    %v1181 = vsub.s32 2, %v1180
    %v1182 = vrot.slane %v1142, %v1181
    %v1183 = vlaneseq
    %v1184 = vshrl.u32 %v1183, 7
    %v1185 = vsub.s32 6, %v1184
    %v1186 = vrot.slane %v1142, %v1185
    %v1187 = vlaneseq
    %v1188 = vshrl.u32 %v1187, 7
    %v1189 = vsub.s32 2, %v1188
    %v1190 = vrot.slane %v1143, %v1189
    %v1191 = vlaneseq
    %v1192 = vshrl.u32 %v1191, 7
    %v1193 = vsub.s32 6, %v1192
    %v1194 = vrot.slane %v1143, %v1193
    %v1195 = vlaneseq
    %v1196 = vshrl.u32 %v1195, 7
    %v1197 = vsub.s32 2, %v1196
    %v1198 = vrot.slane %v1144, %v1197
    %v1199 = vlaneseq
    %v1200 = vshrl.u32 %v1199, 7
    %v1201 = vsub.s32 6, %v1200
    %v1202 = vrot.slane %v1144, %v1201
    %v1203 = vlaneseq
    %v1204 = vshrl.u32 %v1203, 7
    %v1205 = vsub.s32 2, %v1204
    %v1206 = vrot.slane %v1145, %v1205
    %v1207 = vlaneseq
    %v1208 = vshrl.u32 %v1207, 7
    %v1209 = vsub.s32 6, %v1208
    %v1210 = vrot.slane %v1145, %v1209
    %v1211 = vlaneseq
    %v1212 = vshrl.u32 %v1211, 7
    %v1213 = vsub.s32 2, %v1212
    %v1214 = vrot.slane %v1146, %v1213
    %v1215 = vlaneseq
    %v1216 = vshrl.u32 %v1215, 7
    %v1217 = vsub.s32 6, %v1216
    %v1218 = vrot.slane %v1146, %v1217
    %v1219 = vsel %vm249, %v1166, %v1158
    %v1220 = vsel %vm251, %v1174, %v1219
    %v1221 = vsel %vm253, %v1182, %v1220
    %v1222 = vsel %vm255, %v1190, %v1221
    %v1223 = vsel %vm257, %v1198, %v1222
    %v1224 = vsel %vm259, %v1206, %v1223
    %v1225 = vsel %vm261, %v1214, %v1224
    %v1226 = vsel %vm249, %v1170, %v1162
    %v1227 = vsel %vm251, %v1178, %v1226
    %v1228 = vsel %vm253, %v1186, %v1227
    %v1229 = vsel %vm255, %v1194, %v1228
    %v1230 = vsel %vm257, %v1202, %v1229
    %v1231 = vsel %vm259, %v1210, %v1230
    %v1232 = vsel %vm261, %v1218, %v1231
    %1235 = vrot.lane.b32.xlu0 %v1225, 1
    %v1236 = vpop.permute.xlu0 %1235
    %1237 = vrot.lane.b32.xlu0 %v1232, 1
    %v1238 = vpop.permute.xlu0 %1237
    %v1239 = vsel %vm78, %v1236, %v1238
    %v1240 = vsel %vm78, %v1238, %v1236
    %v1241 = vmul.f32 %v483, %v1240
    %v1242 = vmul.f32 %v487, %v1239
    %1243 = vrot.lane.b32.xlu0 %v1225, 127
    %v1244 = vpop.permute.xlu0 %1243
    %1245 = vrot.lane.b32.xlu0 %v1232, 127
    %v1246 = vpop.permute.xlu0 %1245
    %v1247 = vsel %vm71, %v1244, %v1246
    %v1248 = vsel %vm71, %v1246, %v1244
    %v1249 = vmul.f32 %v499, %v1247
    %v1250 = vmul.f32 %v503, %v1248
    %1251 = vrot.lane.b32.xlu0 %v1225, 2
    %v1252 = vpop.permute.xlu0 %1251
    %1253 = vrot.lane.b32.xlu0 %v1232, 2
    %v1254 = vpop.permute.xlu0 %1253
    %v1255 = vsel %vm510, %v1252, %v1254
    %v1256 = vsel %vm510, %v1254, %v1252
    %v1257 = vmul.f32 %v516, %v1256
    %v1258 = vmul.f32 %v520, %v1255
    %1259 = vrot.lane.b32.xlu0 %v1225, 126
    %v1260 = vpop.permute.xlu0 %1259
    %1261 = vrot.lane.b32.xlu0 %v1232, 126
    %v1262 = vpop.permute.xlu0 %1261
    %v1263 = vsel %vm527, %v1260, %v1262
    %v1264 = vsel %vm527, %v1262, %v1260
    %v1265 = vmul.f32 %v533, %v1263
    %v1266 = vmul.f32 %v537, %v1264
    %1267 = vrot.lane.b32.xlu0 %v1225, 16
    %v1268 = vpop.permute.xlu0 %1267
    %1269 = vrot.lane.b32.xlu0 %v1232, 16
    %v1270 = vpop.permute.xlu0 %1269
    %v1271 = vsel %vm283, %v1268, %v1270
    %v1272 = vsel %vm283, %v1270, %v1268
    %v1273 = vmul.f32 %v549, %v1272
    %v1274 = vmul.f32 %v553, %v1271
    %1275 = vrot.lane.b32.xlu0 %v1225, 112
    %v1276 = vpop.permute.xlu0 %1275
    %1277 = vrot.lane.b32.xlu0 %v1232, 112
    %v1278 = vpop.permute.xlu0 %1277
    %v1279 = vsel %vm276, %v1276, %v1278
    %v1280 = vsel %vm276, %v1278, %v1276
    %v1281 = vmul.f32 %v565, %v1279
    %v1282 = vmul.f32 %v569, %v1280
    %1283 = vrot.lane.b32.xlu0 %v1225, 32
    %v1284 = vpop.permute.xlu0 %1283
    %1285 = vrot.lane.b32.xlu0 %v1232, 32
    %v1286 = vpop.permute.xlu0 %1285
    %v1287 = vsel %vm576, %v1284, %v1286
    %v1288 = vsel %vm576, %v1286, %v1284
    %v1289 = vmul.f32 %v582, %v1288
    %v1290 = vmul.f32 %v586, %v1287
    %1291 = vrot.lane.b32.xlu0 %v1225, 96
    %v1292 = vpop.permute.xlu0 %1291
    %1293 = vrot.lane.b32.xlu0 %v1232, 96
    %v1294 = vpop.permute.xlu0 %1293
    %v1295 = vsel %vm593, %v1292, %v1294
    %v1296 = vsel %vm593, %v1294, %v1292
    %v1297 = vmul.f32 %v599, %v1295
    %v1298 = vmul.f32 %v603, %v1296
    %v1299 = vadd.f32 %v1241, %v1249
    %v1300 = vadd.f32 %v1242, %v1250
    %v1301 = vadd.f32 %v1257, %v1265
    %v1302 = vadd.f32 %v1258, %v1266
    %v1303 = vadd.f32 %v1299, %v1301
    %v1304 = vadd.f32 %v1300, %v1302
    %v1305 = vadd.f32 %v1273, %v1281
    %v1306 = vadd.f32 %v1274, %v1282
    %v1307 = vadd.f32 %v1289, %v1297
    %v1308 = vadd.f32 %v1290, %v1298
    %v1309 = vadd.f32 %v1305, %v1307
    %v1310 = vadd.f32 %v1306, %v1308
    %v1311 = vadd.f32 %v1303, %v1309
    %v1312 = vadd.f32 %v1304, %v1310
    %v1313 = vmul.f32 %v620, %v1139
    %v1314 = vmul.f32 %v620, %v1140
    %v1315 = vmul.f32 %v620, %v1141
    %v1316 = vmul.f32 %v620, %v1142
    %v1317 = vmul.f32 %v620, %v1143
    %v1318 = vmul.f32 %v620, %v1144
    %v1319 = vmul.f32 %v620, %v1145
    %v1320 = vmul.f32 %v620, %v1146
    %v1329 = vlaneseq
    %v1330 = vshrl.u32 %v1329, 7
    %v1331 = vsub.s32 2, %v1330
    %v1332 = vrot.slane %v1313, %v1331
    %v1333 = vlaneseq
    %v1334 = vshrl.u32 %v1333, 7
    %v1335 = vsub.s32 6, %v1334
    %v1336 = vrot.slane %v1313, %v1335
    %v1337 = vlaneseq
    %v1338 = vshrl.u32 %v1337, 7
    %v1339 = vsub.s32 2, %v1338
    %v1340 = vrot.slane %v1314, %v1339
    %v1341 = vlaneseq
    %v1342 = vshrl.u32 %v1341, 7
    %v1343 = vsub.s32 6, %v1342
    %v1344 = vrot.slane %v1314, %v1343
    %v1345 = vlaneseq
    %v1346 = vshrl.u32 %v1345, 7
    %v1347 = vsub.s32 2, %v1346
    %v1348 = vrot.slane %v1315, %v1347
    %v1349 = vlaneseq
    %v1350 = vshrl.u32 %v1349, 7
    %v1351 = vsub.s32 6, %v1350
    %v1352 = vrot.slane %v1315, %v1351
    %v1353 = vlaneseq
    %v1354 = vshrl.u32 %v1353, 7
    %v1355 = vsub.s32 2, %v1354
    %v1356 = vrot.slane %v1316, %v1355
    %v1357 = vlaneseq
    %v1358 = vshrl.u32 %v1357, 7
    %v1359 = vsub.s32 6, %v1358
    %v1360 = vrot.slane %v1316, %v1359
    %v1361 = vlaneseq
    %v1362 = vshrl.u32 %v1361, 7
    %v1363 = vsub.s32 2, %v1362
    %v1364 = vrot.slane %v1317, %v1363
    %v1365 = vlaneseq
    %v1366 = vshrl.u32 %v1365, 7
    %v1367 = vsub.s32 6, %v1366
    %v1368 = vrot.slane %v1317, %v1367
    %v1369 = vlaneseq
    %v1370 = vshrl.u32 %v1369, 7
    %v1371 = vsub.s32 2, %v1370
    %v1372 = vrot.slane %v1318, %v1371
    %v1373 = vlaneseq
    %v1374 = vshrl.u32 %v1373, 7
    %v1375 = vsub.s32 6, %v1374
    %v1376 = vrot.slane %v1318, %v1375
    %v1377 = vlaneseq
    %v1378 = vshrl.u32 %v1377, 7
    %v1379 = vsub.s32 2, %v1378
    %v1380 = vrot.slane %v1319, %v1379
    %v1381 = vlaneseq
    %v1382 = vshrl.u32 %v1381, 7
    %v1383 = vsub.s32 6, %v1382
    %v1384 = vrot.slane %v1319, %v1383
    %v1385 = vlaneseq
    %v1386 = vshrl.u32 %v1385, 7
    %v1387 = vsub.s32 2, %v1386
    %v1388 = vrot.slane %v1320, %v1387
    %v1389 = vlaneseq
    %v1390 = vshrl.u32 %v1389, 7
    %v1391 = vsub.s32 6, %v1390
    %v1392 = vrot.slane %v1320, %v1391
    %v1393 = vsel %vm249, %v1340, %v1332
    %v1394 = vsel %vm251, %v1348, %v1393
    %v1395 = vsel %vm253, %v1356, %v1394
    %v1396 = vsel %vm255, %v1364, %v1395
    %v1397 = vsel %vm257, %v1372, %v1396
    %v1398 = vsel %vm259, %v1380, %v1397
    %v1399 = vsel %vm261, %v1388, %v1398
    %v1400 = vsel %vm249, %v1344, %v1336
    %v1401 = vsel %vm251, %v1352, %v1400
    %v1402 = vsel %vm253, %v1360, %v1401
    %v1403 = vsel %vm255, %v1368, %v1402
    %v1404 = vsel %vm257, %v1376, %v1403
    %v1405 = vsel %vm259, %v1384, %v1404
    %v1406 = vsel %vm261, %v1392, %v1405
    %v1409 = vadd.f32 %v1311, %v1399
    %v1410 = vadd.f32 %v1312, %v1406
    %v1411 = vmul.f32 %v1409, 2.0
    %v1412 = vmul.f32 %v1410, 2.0
    %v1413 = vadd.f32 %v717, %v1411
    %v1414 = vadd.f32 %v718, %v1412
    %v1415 = vmul.f32 %v1409, 0.25
    %v1416 = vmul.f32 %v1410, 0.25
    %v1419 = vcombine.low %v1415, %v1416
    %v1420 = vcombine.high %v1415, %v1416
    %v1421 = vrot.slane %v1419, 6
    %v1422 = vrot.slane %v1419, 7
    %v1423 = vrot.slane %v1419, 1
    %v1424 = vrot.slane %v1420, 6
    %v1425 = vrot.slane %v1420, 7
    %v1426 = vrot.slane %v1420, 1
    %v1435 = vadd.f32 %v378, %v1421
    %v1436 = vadd.f32 %v379, %v1422
    %v1437 = vadd.f32 %v380, %v1419
    %v1438 = vadd.f32 %v381, %v1423
    %v1439 = vadd.f32 %v382, %v1424
    %v1440 = vadd.f32 %v383, %v1425
    %v1441 = vadd.f32 %v384, %v1420
    %v1442 = vadd.f32 %v385, %v1426
    %v1451 = vlaneseq
    %v1452 = vshrl.u32 %v1451, 7
    %v1453 = vsub.s32 2, %v1452
    %v1454 = vrot.slane %v1435, %v1453
    %v1455 = vlaneseq
    %v1456 = vshrl.u32 %v1455, 7
    %v1457 = vsub.s32 6, %v1456
    %v1458 = vrot.slane %v1435, %v1457
    %v1459 = vlaneseq
    %v1460 = vshrl.u32 %v1459, 7
    %v1461 = vsub.s32 2, %v1460
    %v1462 = vrot.slane %v1436, %v1461
    %v1463 = vlaneseq
    %v1464 = vshrl.u32 %v1463, 7
    %v1465 = vsub.s32 6, %v1464
    %v1466 = vrot.slane %v1436, %v1465
    %v1467 = vlaneseq
    %v1468 = vshrl.u32 %v1467, 7
    %v1469 = vsub.s32 2, %v1468
    %v1470 = vrot.slane %v1437, %v1469
    %v1471 = vlaneseq
    %v1472 = vshrl.u32 %v1471, 7
    %v1473 = vsub.s32 6, %v1472
    %v1474 = vrot.slane %v1437, %v1473
    %v1475 = vlaneseq
    %v1476 = vshrl.u32 %v1475, 7
    %v1477 = vsub.s32 2, %v1476
    %v1478 = vrot.slane %v1438, %v1477
    %v1479 = vlaneseq
    %v1480 = vshrl.u32 %v1479, 7
    %v1481 = vsub.s32 6, %v1480
    %v1482 = vrot.slane %v1438, %v1481
    %v1483 = vlaneseq
    %v1484 = vshrl.u32 %v1483, 7
    %v1485 = vsub.s32 2, %v1484
    %v1486 = vrot.slane %v1439, %v1485
    %v1487 = vlaneseq
    %v1488 = vshrl.u32 %v1487, 7
    %v1489 = vsub.s32 6, %v1488
    %v1490 = vrot.slane %v1439, %v1489
    %v1491 = vlaneseq
    %v1492 = vshrl.u32 %v1491, 7
    %v1493 = vsub.s32 2, %v1492
    %v1494 = vrot.slane %v1440, %v1493
    %v1495 = vlaneseq
    %v1496 = vshrl.u32 %v1495, 7
    %v1497 = vsub.s32 6, %v1496
    %v1498 = vrot.slane %v1440, %v1497
    %v1499 = vlaneseq
    %v1500 = vshrl.u32 %v1499, 7
    %v1501 = vsub.s32 2, %v1500
    %v1502 = vrot.slane %v1441, %v1501
    %v1503 = vlaneseq
    %v1504 = vshrl.u32 %v1503, 7
    %v1505 = vsub.s32 6, %v1504
    %v1506 = vrot.slane %v1441, %v1505
    %v1507 = vlaneseq
    %v1508 = vshrl.u32 %v1507, 7
    %v1509 = vsub.s32 2, %v1508
    %v1510 = vrot.slane %v1442, %v1509
    %v1511 = vlaneseq
    %v1512 = vshrl.u32 %v1511, 7
    %v1513 = vsub.s32 6, %v1512
    %v1514 = vrot.slane %v1442, %v1513
    %v1515 = vsel %vm249, %v1462, %v1454
    %v1516 = vsel %vm251, %v1470, %v1515
    %v1517 = vsel %vm253, %v1478, %v1516
    %v1518 = vsel %vm255, %v1486, %v1517
    %v1519 = vsel %vm257, %v1494, %v1518
    %v1520 = vsel %vm259, %v1502, %v1519
    %v1521 = vsel %vm261, %v1510, %v1520
    %v1522 = vsel %vm249, %v1466, %v1458
    %v1523 = vsel %vm251, %v1474, %v1522
    %v1524 = vsel %vm253, %v1482, %v1523
    %v1525 = vsel %vm255, %v1490, %v1524
    %v1526 = vsel %vm257, %v1498, %v1525
    %v1527 = vsel %vm259, %v1506, %v1526
    %v1528 = vsel %vm261, %v1514, %v1527
    %1531 = vrot.lane.b32.xlu0 %v1521, 127
    %v1532 = vpop.permute.xlu0 %1531
    %1533 = vrot.lane.b32.xlu0 %v1528, 127
    %v1534 = vpop.permute.xlu0 %1533
    %v1535 = vsel %vm71, %v1532, %v1534
    %v1536 = vsel %vm71, %v1534, %v1532
    %1537 = vrot.lane.b32.xlu0 %v1521, 1
    %v1538 = vpop.permute.xlu0 %1537
    %1539 = vrot.lane.b32.xlu0 %v1528, 1
    %v1540 = vpop.permute.xlu0 %1539
    %v1541 = vsel %vm78, %v1538, %v1540
    %v1542 = vsel %vm78, %v1540, %v1538
    %v1545 = vcombine.low %v1542, %v1541
    %v1546 = vcombine.high %v1542, %v1541
    %v1547 = vrot.slane %v1545, 1
    %v1548 = vrot.slane %v1545, 2
    %v1549 = vrot.slane %v1545, 3
    %v1550 = vrot.slane %v1546, 1
    %v1551 = vrot.slane %v1546, 2
    %v1552 = vrot.slane %v1546, 3
    %v1561 = vrot.slane %v1435, 6
    %v1562 = vrot.slane %v1561, 4
    %v1563 = vrot.slane %v1436, 6
    %v1564 = vrot.slane %v1563, 4
    %v1565 = vrot.slane %v1437, 6
    %v1566 = vrot.slane %v1565, 4
    %v1567 = vrot.slane %v1438, 6
    %v1568 = vrot.slane %v1567, 4
    %v1569 = vrot.slane %v1439, 6
    %v1570 = vrot.slane %v1569, 4
    %v1571 = vrot.slane %v1440, 6
    %v1572 = vrot.slane %v1571, 4
    %v1573 = vrot.slane %v1441, 6
    %v1574 = vrot.slane %v1573, 4
    %v1575 = vrot.slane %v1442, 6
    %v1576 = vrot.slane %v1575, 4
    %v1585 = vsel %vm82, %v1545, %v1562
    %v1586 = vsel %vm82, %v1547, %v1564
    %v1587 = vsel %vm82, %v1548, %v1566
    %v1588 = vsel %vm82, %v1549, %v1568
    %v1589 = vsel %vm82, %v1546, %v1570
    %v1590 = vsel %vm82, %v1550, %v1572
    %v1591 = vsel %vm82, %v1551, %v1574
    %v1592 = vsel %vm82, %v1552, %v1576
    %v1595 = vcombine.low %v1535, %v1536
    %v1596 = vcombine.high %v1535, %v1536
    %v1597 = vrot.slane %v1595, 7
    %v1598 = vrot.slane %v1595, 1
    %v1599 = vrot.slane %v1595, 2
    %v1600 = vrot.slane %v1596, 7
    %v1601 = vrot.slane %v1596, 1
    %v1602 = vrot.slane %v1596, 2
    %v1619 = vrot.slane %v1585, 7
    %v1620 = vrot.slane %v1586, 7
    %v1621 = vrot.slane %v1587, 7
    %v1622 = vrot.slane %v1588, 7
    %v1623 = vrot.slane %v1589, 7
    %v1624 = vrot.slane %v1590, 7
    %v1625 = vrot.slane %v1591, 7
    %v1626 = vrot.slane %v1592, 7
    %v1635 = vsel %vm82, %v1597, %v1619
    %v1636 = vsel %vm82, %v1595, %v1620
    %v1637 = vsel %vm82, %v1598, %v1621
    %v1638 = vsel %vm82, %v1599, %v1622
    %v1639 = vsel %vm82, %v1600, %v1623
    %v1640 = vsel %vm82, %v1596, %v1624
    %v1641 = vsel %vm82, %v1601, %v1625
    %v1642 = vsel %vm82, %v1602, %v1626
    %v1651 = vlaneseq
    %v1652 = vshrl.u32 %v1651, 7
    %v1653 = vsub.s32 1, %v1652
    %v1654 = vrot.slane %v1635, %v1653
    %v1655 = vlaneseq
    %v1656 = vshrl.u32 %v1655, 7
    %v1657 = vsub.s32 5, %v1656
    %v1658 = vrot.slane %v1635, %v1657
    %v1659 = vlaneseq
    %v1660 = vshrl.u32 %v1659, 7
    %v1661 = vsub.s32 1, %v1660
    %v1662 = vrot.slane %v1636, %v1661
    %v1663 = vlaneseq
    %v1664 = vshrl.u32 %v1663, 7
    %v1665 = vsub.s32 5, %v1664
    %v1666 = vrot.slane %v1636, %v1665
    %v1667 = vlaneseq
    %v1668 = vshrl.u32 %v1667, 7
    %v1669 = vsub.s32 1, %v1668
    %v1670 = vrot.slane %v1637, %v1669
    %v1671 = vlaneseq
    %v1672 = vshrl.u32 %v1671, 7
    %v1673 = vsub.s32 5, %v1672
    %v1674 = vrot.slane %v1637, %v1673
    %v1675 = vlaneseq
    %v1676 = vshrl.u32 %v1675, 7
    %v1677 = vsub.s32 1, %v1676
    %v1678 = vrot.slane %v1638, %v1677
    %v1679 = vlaneseq
    %v1680 = vshrl.u32 %v1679, 7
    %v1681 = vsub.s32 5, %v1680
    %v1682 = vrot.slane %v1638, %v1681
    %v1683 = vlaneseq
    %v1684 = vshrl.u32 %v1683, 7
    %v1685 = vsub.s32 1, %v1684
    %v1686 = vrot.slane %v1639, %v1685
    %v1687 = vlaneseq
    %v1688 = vshrl.u32 %v1687, 7
    %v1689 = vsub.s32 5, %v1688
    %v1690 = vrot.slane %v1639, %v1689
    %v1691 = vlaneseq
    %v1692 = vshrl.u32 %v1691, 7
    %v1693 = vsub.s32 1, %v1692
    %v1694 = vrot.slane %v1640, %v1693
    %v1695 = vlaneseq
    %v1696 = vshrl.u32 %v1695, 7
    %v1697 = vsub.s32 5, %v1696
    %v1698 = vrot.slane %v1640, %v1697
    %v1699 = vlaneseq
    %v1700 = vshrl.u32 %v1699, 7
    %v1701 = vsub.s32 1, %v1700
    %v1702 = vrot.slane %v1641, %v1701
    %v1703 = vlaneseq
    %v1704 = vshrl.u32 %v1703, 7
    %v1705 = vsub.s32 5, %v1704
    %v1706 = vrot.slane %v1641, %v1705
    %v1707 = vlaneseq
    %v1708 = vshrl.u32 %v1707, 7
    %v1709 = vsub.s32 1, %v1708
    %v1710 = vrot.slane %v1642, %v1709
    %v1711 = vlaneseq
    %v1712 = vshrl.u32 %v1711, 7
    %v1713 = vsub.s32 5, %v1712
    %v1714 = vrot.slane %v1642, %v1713
    %v1715 = vsel %vm249, %v1662, %v1654
    %v1716 = vsel %vm251, %v1670, %v1715
    %v1717 = vsel %vm253, %v1678, %v1716
    %v1718 = vsel %vm255, %v1686, %v1717
    %v1719 = vsel %vm257, %v1694, %v1718
    %v1720 = vsel %vm259, %v1702, %v1719
    %v1721 = vsel %vm261, %v1710, %v1720
    %v1722 = vsel %vm249, %v1666, %v1658
    %v1723 = vsel %vm251, %v1674, %v1722
    %v1724 = vsel %vm253, %v1682, %v1723
    %v1725 = vsel %vm255, %v1690, %v1724
    %v1726 = vsel %vm257, %v1698, %v1725
    %v1727 = vsel %vm259, %v1706, %v1726
    %v1728 = vsel %vm261, %v1714, %v1727
    %1731 = vrot.lane.b32.xlu0 %v1721, 112
    %v1732 = vpop.permute.xlu0 %1731
    %1733 = vrot.lane.b32.xlu0 %v1728, 112
    %v1734 = vpop.permute.xlu0 %1733
    %v1735 = vsel %vm276, %v1732, %v1734
    %v1736 = vsel %vm276, %v1734, %v1732
    %1737 = vrot.lane.b32.xlu0 %v1721, 16
    %v1738 = vpop.permute.xlu0 %1737
    %1739 = vrot.lane.b32.xlu0 %v1728, 16
    %v1740 = vpop.permute.xlu0 %1739
    %v1741 = vsel %vm283, %v1738, %v1740
    %v1742 = vsel %vm283, %v1740, %v1738
    %v1745 = vcombine.low %v1742, %v1741
    %v1746 = vcombine.high %v1742, %v1741
    %v1747 = vrot.slane %v1745, 5
    %v1748 = vrot.slane %v1745, 6
    %v1749 = vrot.slane %v1745, 7
    %v1750 = vrot.slane %v1746, 5
    %v1751 = vrot.slane %v1746, 6
    %v1752 = vrot.slane %v1746, 7
    %v1761 = vrot.slane %v1635, 6
    %v1762 = vrot.slane %v1636, 6
    %v1763 = vrot.slane %v1637, 6
    %v1764 = vrot.slane %v1638, 6
    %v1765 = vrot.slane %v1639, 6
    %v1766 = vrot.slane %v1640, 6
    %v1767 = vrot.slane %v1641, 6
    %v1768 = vrot.slane %v1642, 6
    %v1777 = vsel %vm82, %v1747, %v1761
    %v1778 = vsel %vm82, %v1748, %v1762
    %v1779 = vsel %vm82, %v1749, %v1763
    %v1780 = vsel %vm82, %v1745, %v1764
    %v1781 = vsel %vm82, %v1750, %v1765
    %v1782 = vsel %vm82, %v1751, %v1766
    %v1783 = vsel %vm82, %v1752, %v1767
    %v1784 = vsel %vm82, %v1746, %v1768
    %v1787 = vcombine.low %v1735, %v1736
    %v1788 = vcombine.high %v1735, %v1736
    %v1789 = vrot.slane %v1787, 6
    %v1790 = vrot.slane %v1787, 7
    %v1791 = vrot.slane %v1787, 1
    %v1792 = vrot.slane %v1788, 6
    %v1793 = vrot.slane %v1788, 7
    %v1794 = vrot.slane %v1788, 1
    %v1811 = vrot.slane %v1777, 5
    %v1812 = vrot.slane %v1811, 4
    %v1813 = vrot.slane %v1778, 5
    %v1814 = vrot.slane %v1813, 4
    %v1815 = vrot.slane %v1779, 5
    %v1816 = vrot.slane %v1815, 4
    %v1817 = vrot.slane %v1780, 5
    %v1818 = vrot.slane %v1817, 4
    %v1819 = vrot.slane %v1781, 5
    %v1820 = vrot.slane %v1819, 4
    %v1821 = vrot.slane %v1782, 5
    %v1822 = vrot.slane %v1821, 4
    %v1823 = vrot.slane %v1783, 5
    %v1824 = vrot.slane %v1823, 4
    %v1825 = vrot.slane %v1784, 5
    %v1826 = vrot.slane %v1825, 4
    %v1835 = vsel %vm82, %v1789, %v1812
    %v1836 = vsel %vm82, %v1790, %v1814
    %v1837 = vsel %vm82, %v1787, %v1816
    %v1838 = vsel %vm82, %v1791, %v1818
    %v1839 = vsel %vm82, %v1792, %v1820
    %v1840 = vsel %vm82, %v1793, %v1822
    %v1841 = vsel %vm82, %v1788, %v1824
    %v1842 = vsel %vm82, %v1794, %v1826
    %v1851 = vlaneseq
    %v1852 = vshrl.u32 %v1851, 7
    %v1853 = vsub.s32 2, %v1852
    %v1854 = vrot.slane %v1835, %v1853
    %v1855 = vlaneseq
    %v1856 = vshrl.u32 %v1855, 7
    %v1857 = vsub.s32 6, %v1856
    %v1858 = vrot.slane %v1835, %v1857
    %v1859 = vlaneseq
    %v1860 = vshrl.u32 %v1859, 7
    %v1861 = vsub.s32 2, %v1860
    %v1862 = vrot.slane %v1836, %v1861
    %v1863 = vlaneseq
    %v1864 = vshrl.u32 %v1863, 7
    %v1865 = vsub.s32 6, %v1864
    %v1866 = vrot.slane %v1836, %v1865
    %v1867 = vlaneseq
    %v1868 = vshrl.u32 %v1867, 7
    %v1869 = vsub.s32 2, %v1868
    %v1870 = vrot.slane %v1837, %v1869
    %v1871 = vlaneseq
    %v1872 = vshrl.u32 %v1871, 7
    %v1873 = vsub.s32 6, %v1872
    %v1874 = vrot.slane %v1837, %v1873
    %v1875 = vlaneseq
    %v1876 = vshrl.u32 %v1875, 7
    %v1877 = vsub.s32 2, %v1876
    %v1878 = vrot.slane %v1838, %v1877
    %v1879 = vlaneseq
    %v1880 = vshrl.u32 %v1879, 7
    %v1881 = vsub.s32 6, %v1880
    %v1882 = vrot.slane %v1838, %v1881
    %v1883 = vlaneseq
    %v1884 = vshrl.u32 %v1883, 7
    %v1885 = vsub.s32 2, %v1884
    %v1886 = vrot.slane %v1839, %v1885
    %v1887 = vlaneseq
    %v1888 = vshrl.u32 %v1887, 7
    %v1889 = vsub.s32 6, %v1888
    %v1890 = vrot.slane %v1839, %v1889
    %v1891 = vlaneseq
    %v1892 = vshrl.u32 %v1891, 7
    %v1893 = vsub.s32 2, %v1892
    %v1894 = vrot.slane %v1840, %v1893
    %v1895 = vlaneseq
    %v1896 = vshrl.u32 %v1895, 7
    %v1897 = vsub.s32 6, %v1896
    %v1898 = vrot.slane %v1840, %v1897
    %v1899 = vlaneseq
    %v1900 = vshrl.u32 %v1899, 7
    %v1901 = vsub.s32 2, %v1900
    %v1902 = vrot.slane %v1841, %v1901
    %v1903 = vlaneseq
    %v1904 = vshrl.u32 %v1903, 7
    %v1905 = vsub.s32 6, %v1904
    %v1906 = vrot.slane %v1841, %v1905
    %v1907 = vlaneseq
    %v1908 = vshrl.u32 %v1907, 7
    %v1909 = vsub.s32 2, %v1908
    %v1910 = vrot.slane %v1842, %v1909
    %v1911 = vlaneseq
    %v1912 = vshrl.u32 %v1911, 7
    %v1913 = vsub.s32 6, %v1912
    %v1914 = vrot.slane %v1842, %v1913
    %v1915 = vsel %vm249, %v1862, %v1854
    %v1916 = vsel %vm251, %v1870, %v1915
    %v1917 = vsel %vm253, %v1878, %v1916
    %v1918 = vsel %vm255, %v1886, %v1917
    %v1919 = vsel %vm257, %v1894, %v1918
    %v1920 = vsel %vm259, %v1902, %v1919
    %v1921 = vsel %vm261, %v1910, %v1920
    %v1922 = vsel %vm249, %v1866, %v1858
    %v1923 = vsel %vm251, %v1874, %v1922
    %v1924 = vsel %vm253, %v1882, %v1923
    %v1925 = vsel %vm255, %v1890, %v1924
    %v1926 = vsel %vm257, %v1898, %v1925
    %v1927 = vsel %vm259, %v1906, %v1926
    %v1928 = vsel %vm261, %v1914, %v1927
    %1931 = vrot.lane.b32.xlu0 %v1921, 1
    %v1932 = vpop.permute.xlu0 %1931
    %1933 = vrot.lane.b32.xlu0 %v1928, 1
    %v1934 = vpop.permute.xlu0 %1933
    %v1935 = vsel %vm78, %v1932, %v1934
    %v1936 = vsel %vm78, %v1934, %v1932
    %v1937 = vmul.f32 %v483, %v1936
    %v1938 = vmul.f32 %v487, %v1935
    %1939 = vrot.lane.b32.xlu0 %v1921, 127
    %v1940 = vpop.permute.xlu0 %1939
    %1941 = vrot.lane.b32.xlu0 %v1928, 127
    %v1942 = vpop.permute.xlu0 %1941
    %v1943 = vsel %vm71, %v1940, %v1942
    %v1944 = vsel %vm71, %v1942, %v1940
    %v1945 = vmul.f32 %v499, %v1943
    %v1946 = vmul.f32 %v503, %v1944
    %1947 = vrot.lane.b32.xlu0 %v1921, 2
    %v1948 = vpop.permute.xlu0 %1947
    %1949 = vrot.lane.b32.xlu0 %v1928, 2
    %v1950 = vpop.permute.xlu0 %1949
    %v1951 = vsel %vm510, %v1948, %v1950
    %v1952 = vsel %vm510, %v1950, %v1948
    %v1953 = vmul.f32 %v516, %v1952
    %v1954 = vmul.f32 %v520, %v1951
    %1955 = vrot.lane.b32.xlu0 %v1921, 126
    %v1956 = vpop.permute.xlu0 %1955
    %1957 = vrot.lane.b32.xlu0 %v1928, 126
    %v1958 = vpop.permute.xlu0 %1957
    %v1959 = vsel %vm527, %v1956, %v1958
    %v1960 = vsel %vm527, %v1958, %v1956
    %v1961 = vmul.f32 %v533, %v1959
    %v1962 = vmul.f32 %v537, %v1960
    %1963 = vrot.lane.b32.xlu0 %v1921, 16
    %v1964 = vpop.permute.xlu0 %1963
    %1965 = vrot.lane.b32.xlu0 %v1928, 16
    %v1966 = vpop.permute.xlu0 %1965
    %v1967 = vsel %vm283, %v1964, %v1966
    %v1968 = vsel %vm283, %v1966, %v1964
    %v1969 = vmul.f32 %v549, %v1968
    %v1970 = vmul.f32 %v553, %v1967
    %1971 = vrot.lane.b32.xlu0 %v1921, 112
    %v1972 = vpop.permute.xlu0 %1971
    %1973 = vrot.lane.b32.xlu0 %v1928, 112
    %v1974 = vpop.permute.xlu0 %1973
    %v1975 = vsel %vm276, %v1972, %v1974
    %v1976 = vsel %vm276, %v1974, %v1972
    %v1977 = vmul.f32 %v565, %v1975
    %v1978 = vmul.f32 %v569, %v1976
    %1979 = vrot.lane.b32.xlu0 %v1921, 32
    %v1980 = vpop.permute.xlu0 %1979
    %1981 = vrot.lane.b32.xlu0 %v1928, 32
    %v1982 = vpop.permute.xlu0 %1981
    %v1983 = vsel %vm576, %v1980, %v1982
    %v1984 = vsel %vm576, %v1982, %v1980
    %v1985 = vmul.f32 %v582, %v1984
    %v1986 = vmul.f32 %v586, %v1983
    %1987 = vrot.lane.b32.xlu0 %v1921, 96
    %v1988 = vpop.permute.xlu0 %1987
    %1989 = vrot.lane.b32.xlu0 %v1928, 96
    %v1990 = vpop.permute.xlu0 %1989
    %v1991 = vsel %vm593, %v1988, %v1990
    %v1992 = vsel %vm593, %v1990, %v1988
    %v1993 = vmul.f32 %v599, %v1991
    %v1994 = vmul.f32 %v603, %v1992
    %v1995 = vadd.f32 %v1937, %v1945
    %v1996 = vadd.f32 %v1938, %v1946
    %v1997 = vadd.f32 %v1953, %v1961
    %v1998 = vadd.f32 %v1954, %v1962
    %v1999 = vadd.f32 %v1995, %v1997
    %v2000 = vadd.f32 %v1996, %v1998
    %v2001 = vadd.f32 %v1969, %v1977
    %v2002 = vadd.f32 %v1970, %v1978
    %v2003 = vadd.f32 %v1985, %v1993
    %v2004 = vadd.f32 %v1986, %v1994
    %v2005 = vadd.f32 %v2001, %v2003
    %v2006 = vadd.f32 %v2002, %v2004
    %v2007 = vadd.f32 %v1999, %v2005
    %v2008 = vadd.f32 %v2000, %v2006
    %v2009 = vmul.f32 %v620, %v1835
    %v2010 = vmul.f32 %v620, %v1836
    %v2011 = vmul.f32 %v620, %v1837
    %v2012 = vmul.f32 %v620, %v1838
    %v2013 = vmul.f32 %v620, %v1839
    %v2014 = vmul.f32 %v620, %v1840
    %v2015 = vmul.f32 %v620, %v1841
    %v2016 = vmul.f32 %v620, %v1842
    %v2025 = vlaneseq
    %v2026 = vshrl.u32 %v2025, 7
    %v2027 = vsub.s32 2, %v2026
    %v2028 = vrot.slane %v2009, %v2027
    %v2029 = vlaneseq
    %v2030 = vshrl.u32 %v2029, 7
    %v2031 = vsub.s32 6, %v2030
    %v2032 = vrot.slane %v2009, %v2031
    %v2033 = vlaneseq
    %v2034 = vshrl.u32 %v2033, 7
    %v2035 = vsub.s32 2, %v2034
    %v2036 = vrot.slane %v2010, %v2035
    %v2037 = vlaneseq
    %v2038 = vshrl.u32 %v2037, 7
    %v2039 = vsub.s32 6, %v2038
    %v2040 = vrot.slane %v2010, %v2039
    %v2041 = vlaneseq
    %v2042 = vshrl.u32 %v2041, 7
    %v2043 = vsub.s32 2, %v2042
    %v2044 = vrot.slane %v2011, %v2043
    %v2045 = vlaneseq
    %v2046 = vshrl.u32 %v2045, 7
    %v2047 = vsub.s32 6, %v2046
    %v2048 = vrot.slane %v2011, %v2047
    %v2049 = vlaneseq
    %v2050 = vshrl.u32 %v2049, 7
    %v2051 = vsub.s32 2, %v2050
    %v2052 = vrot.slane %v2012, %v2051
    %v2053 = vlaneseq
    %v2054 = vshrl.u32 %v2053, 7
    %v2055 = vsub.s32 6, %v2054
    %v2056 = vrot.slane %v2012, %v2055
    %v2057 = vlaneseq
    %v2058 = vshrl.u32 %v2057, 7
    %v2059 = vsub.s32 2, %v2058
    %v2060 = vrot.slane %v2013, %v2059
    %v2061 = vlaneseq
    %v2062 = vshrl.u32 %v2061, 7
    %v2063 = vsub.s32 6, %v2062
    %v2064 = vrot.slane %v2013, %v2063
    %v2065 = vlaneseq
    %v2066 = vshrl.u32 %v2065, 7
    %v2067 = vsub.s32 2, %v2066
    %v2068 = vrot.slane %v2014, %v2067
    %v2069 = vlaneseq
    %v2070 = vshrl.u32 %v2069, 7
    %v2071 = vsub.s32 6, %v2070
    %v2072 = vrot.slane %v2014, %v2071
    %v2073 = vlaneseq
    %v2074 = vshrl.u32 %v2073, 7
    %v2075 = vsub.s32 2, %v2074
    %v2076 = vrot.slane %v2015, %v2075
    %v2077 = vlaneseq
    %v2078 = vshrl.u32 %v2077, 7
    %v2079 = vsub.s32 6, %v2078
    %v2080 = vrot.slane %v2015, %v2079
    %v2081 = vlaneseq
    %v2082 = vshrl.u32 %v2081, 7
    %v2083 = vsub.s32 2, %v2082
    %v2084 = vrot.slane %v2016, %v2083
    %v2085 = vlaneseq
    %v2086 = vshrl.u32 %v2085, 7
    %v2087 = vsub.s32 6, %v2086
    %v2088 = vrot.slane %v2016, %v2087
    %v2089 = vsel %vm249, %v2036, %v2028
    %v2090 = vsel %vm251, %v2044, %v2089
    %v2091 = vsel %vm253, %v2052, %v2090
    %v2092 = vsel %vm255, %v2060, %v2091
    %v2093 = vsel %vm257, %v2068, %v2092
    %v2094 = vsel %vm259, %v2076, %v2093
    %v2095 = vsel %vm261, %v2084, %v2094
    %v2096 = vsel %vm249, %v2040, %v2032
    %v2097 = vsel %vm251, %v2048, %v2096
    %v2098 = vsel %vm253, %v2056, %v2097
    %v2099 = vsel %vm255, %v2064, %v2098
    %v2100 = vsel %vm257, %v2072, %v2099
    %v2101 = vsel %vm259, %v2080, %v2100
    %v2102 = vsel %vm261, %v2088, %v2101
    %v2105 = vadd.f32 %v2007, %v2095
    %v2106 = vadd.f32 %v2008, %v2102
    %v2107 = vmul.f32 %v2105, 2.0
    %v2108 = vmul.f32 %v2106, 2.0
    %v2109 = vadd.f32 %v1413, %v2107
    %v2110 = vadd.f32 %v1414, %v2108
    %v2111 = vmul.f32 %v2105, 0.5
    %v2112 = vmul.f32 %v2106, 0.5
    %v2115 = vcombine.low %v2111, %v2112
    %v2116 = vcombine.high %v2111, %v2112
    %v2117 = vrot.slane %v2115, 6
    %v2118 = vrot.slane %v2115, 7
    %v2119 = vrot.slane %v2115, 1
    %v2120 = vrot.slane %v2116, 6
    %v2121 = vrot.slane %v2116, 7
    %v2122 = vrot.slane %v2116, 1
    %v2131 = vadd.f32 %v378, %v2117
    %v2132 = vadd.f32 %v379, %v2118
    %v2133 = vadd.f32 %v380, %v2115
    %v2134 = vadd.f32 %v381, %v2119
    %v2135 = vadd.f32 %v382, %v2120
    %v2136 = vadd.f32 %v383, %v2121
    %v2137 = vadd.f32 %v384, %v2116
    %v2138 = vadd.f32 %v385, %v2122
    %v2147 = vlaneseq
    %v2148 = vshrl.u32 %v2147, 7
    %v2149 = vsub.s32 2, %v2148
    %v2150 = vrot.slane %v2131, %v2149
    %v2151 = vlaneseq
    %v2152 = vshrl.u32 %v2151, 7
    %v2153 = vsub.s32 6, %v2152
    %v2154 = vrot.slane %v2131, %v2153
    %v2155 = vlaneseq
    %v2156 = vshrl.u32 %v2155, 7
    %v2157 = vsub.s32 2, %v2156
    %v2158 = vrot.slane %v2132, %v2157
    %v2159 = vlaneseq
    %v2160 = vshrl.u32 %v2159, 7
    %v2161 = vsub.s32 6, %v2160
    %v2162 = vrot.slane %v2132, %v2161
    %v2163 = vlaneseq
    %v2164 = vshrl.u32 %v2163, 7
    %v2165 = vsub.s32 2, %v2164
    %v2166 = vrot.slane %v2133, %v2165
    %v2167 = vlaneseq
    %v2168 = vshrl.u32 %v2167, 7
    %v2169 = vsub.s32 6, %v2168
    %v2170 = vrot.slane %v2133, %v2169
    %v2171 = vlaneseq
    %v2172 = vshrl.u32 %v2171, 7
    %v2173 = vsub.s32 2, %v2172
    %v2174 = vrot.slane %v2134, %v2173
    %v2175 = vlaneseq
    %v2176 = vshrl.u32 %v2175, 7
    %v2177 = vsub.s32 6, %v2176
    %v2178 = vrot.slane %v2134, %v2177
    %v2179 = vlaneseq
    %v2180 = vshrl.u32 %v2179, 7
    %v2181 = vsub.s32 2, %v2180
    %v2182 = vrot.slane %v2135, %v2181
    %v2183 = vlaneseq
    %v2184 = vshrl.u32 %v2183, 7
    %v2185 = vsub.s32 6, %v2184
    %v2186 = vrot.slane %v2135, %v2185
    %v2187 = vlaneseq
    %v2188 = vshrl.u32 %v2187, 7
    %v2189 = vsub.s32 2, %v2188
    %v2190 = vrot.slane %v2136, %v2189
    %v2191 = vlaneseq
    %v2192 = vshrl.u32 %v2191, 7
    %v2193 = vsub.s32 6, %v2192
    %v2194 = vrot.slane %v2136, %v2193
    %v2195 = vlaneseq
    %v2196 = vshrl.u32 %v2195, 7
    %v2197 = vsub.s32 2, %v2196
    %v2198 = vrot.slane %v2137, %v2197
    %v2199 = vlaneseq
    %v2200 = vshrl.u32 %v2199, 7
    %v2201 = vsub.s32 6, %v2200
    %v2202 = vrot.slane %v2137, %v2201
    %v2203 = vlaneseq
    %v2204 = vshrl.u32 %v2203, 7
    %v2205 = vsub.s32 2, %v2204
    %v2206 = vrot.slane %v2138, %v2205
    %v2207 = vlaneseq
    %v2208 = vshrl.u32 %v2207, 7
    %v2209 = vsub.s32 6, %v2208
    %v2210 = vrot.slane %v2138, %v2209
    %v2211 = vsel %vm249, %v2158, %v2150
    %v2212 = vsel %vm251, %v2166, %v2211
    %v2213 = vsel %vm253, %v2174, %v2212
    %v2214 = vsel %vm255, %v2182, %v2213
    %v2215 = vsel %vm257, %v2190, %v2214
    %v2216 = vsel %vm259, %v2198, %v2215
    %v2217 = vsel %vm261, %v2206, %v2216
    %v2218 = vsel %vm249, %v2162, %v2154
    %v2219 = vsel %vm251, %v2170, %v2218
    %v2220 = vsel %vm253, %v2178, %v2219
    %v2221 = vsel %vm255, %v2186, %v2220
    %v2222 = vsel %vm257, %v2194, %v2221
    %v2223 = vsel %vm259, %v2202, %v2222
    %v2224 = vsel %vm261, %v2210, %v2223
    %2227 = vrot.lane.b32.xlu0 %v2217, 127
    %v2228 = vpop.permute.xlu0 %2227
    %2229 = vrot.lane.b32.xlu0 %v2224, 127
    %v2230 = vpop.permute.xlu0 %2229
    %v2231 = vsel %vm71, %v2228, %v2230
    %v2232 = vsel %vm71, %v2230, %v2228
    %2233 = vrot.lane.b32.xlu0 %v2217, 1
    %v2234 = vpop.permute.xlu0 %2233
    %2235 = vrot.lane.b32.xlu0 %v2224, 1
    %v2236 = vpop.permute.xlu0 %2235
    %v2237 = vsel %vm78, %v2234, %v2236
    %v2238 = vsel %vm78, %v2236, %v2234
    %v2241 = vcombine.low %v2238, %v2237
    %v2242 = vcombine.high %v2238, %v2237
    %v2243 = vrot.slane %v2241, 1
    %v2244 = vrot.slane %v2241, 2
    %v2245 = vrot.slane %v2241, 3
    %v2246 = vrot.slane %v2242, 1
    %v2247 = vrot.slane %v2242, 2
    %v2248 = vrot.slane %v2242, 3
    %v2257 = vrot.slane %v2131, 6
    %v2258 = vrot.slane %v2257, 4
    %v2259 = vrot.slane %v2132, 6
    %v2260 = vrot.slane %v2259, 4
    %v2261 = vrot.slane %v2133, 6
    %v2262 = vrot.slane %v2261, 4
    %v2263 = vrot.slane %v2134, 6
    %v2264 = vrot.slane %v2263, 4
    %v2265 = vrot.slane %v2135, 6
    %v2266 = vrot.slane %v2265, 4
    %v2267 = vrot.slane %v2136, 6
    %v2268 = vrot.slane %v2267, 4
    %v2269 = vrot.slane %v2137, 6
    %v2270 = vrot.slane %v2269, 4
    %v2271 = vrot.slane %v2138, 6
    %v2272 = vrot.slane %v2271, 4
    %v2281 = vsel %vm82, %v2241, %v2258
    %v2282 = vsel %vm82, %v2243, %v2260
    %v2283 = vsel %vm82, %v2244, %v2262
    %v2284 = vsel %vm82, %v2245, %v2264
    %v2285 = vsel %vm82, %v2242, %v2266
    %v2286 = vsel %vm82, %v2246, %v2268
    %v2287 = vsel %vm82, %v2247, %v2270
    %v2288 = vsel %vm82, %v2248, %v2272
    %v2291 = vcombine.low %v2231, %v2232
    %v2292 = vcombine.high %v2231, %v2232
    %v2293 = vrot.slane %v2291, 7
    %v2294 = vrot.slane %v2291, 1
    %v2295 = vrot.slane %v2291, 2
    %v2296 = vrot.slane %v2292, 7
    %v2297 = vrot.slane %v2292, 1
    %v2298 = vrot.slane %v2292, 2
    %v2315 = vrot.slane %v2281, 7
    %v2316 = vrot.slane %v2282, 7
    %v2317 = vrot.slane %v2283, 7
    %v2318 = vrot.slane %v2284, 7
    %v2319 = vrot.slane %v2285, 7
    %v2320 = vrot.slane %v2286, 7
    %v2321 = vrot.slane %v2287, 7
    %v2322 = vrot.slane %v2288, 7
    %v2331 = vsel %vm82, %v2293, %v2315
    %v2332 = vsel %vm82, %v2291, %v2316
    %v2333 = vsel %vm82, %v2294, %v2317
    %v2334 = vsel %vm82, %v2295, %v2318
    %v2335 = vsel %vm82, %v2296, %v2319
    %v2336 = vsel %vm82, %v2292, %v2320
    %v2337 = vsel %vm82, %v2297, %v2321
    %v2338 = vsel %vm82, %v2298, %v2322
    %v2347 = vlaneseq
    %v2348 = vshrl.u32 %v2347, 7
    %v2349 = vsub.s32 1, %v2348
    %v2350 = vrot.slane %v2331, %v2349
    %v2351 = vlaneseq
    %v2352 = vshrl.u32 %v2351, 7
    %v2353 = vsub.s32 5, %v2352
    %v2354 = vrot.slane %v2331, %v2353
    %v2355 = vlaneseq
    %v2356 = vshrl.u32 %v2355, 7
    %v2357 = vsub.s32 1, %v2356
    %v2358 = vrot.slane %v2332, %v2357
    %v2359 = vlaneseq
    %v2360 = vshrl.u32 %v2359, 7
    %v2361 = vsub.s32 5, %v2360
    %v2362 = vrot.slane %v2332, %v2361
    %v2363 = vlaneseq
    %v2364 = vshrl.u32 %v2363, 7
    %v2365 = vsub.s32 1, %v2364
    %v2366 = vrot.slane %v2333, %v2365
    %v2367 = vlaneseq
    %v2368 = vshrl.u32 %v2367, 7
    %v2369 = vsub.s32 5, %v2368
    %v2370 = vrot.slane %v2333, %v2369
    %v2371 = vlaneseq
    %v2372 = vshrl.u32 %v2371, 7
    %v2373 = vsub.s32 1, %v2372
    %v2374 = vrot.slane %v2334, %v2373
    %v2375 = vlaneseq
    %v2376 = vshrl.u32 %v2375, 7
    %v2377 = vsub.s32 5, %v2376
    %v2378 = vrot.slane %v2334, %v2377
    %v2379 = vlaneseq
    %v2380 = vshrl.u32 %v2379, 7
    %v2381 = vsub.s32 1, %v2380
    %v2382 = vrot.slane %v2335, %v2381
    %v2383 = vlaneseq
    %v2384 = vshrl.u32 %v2383, 7
    %v2385 = vsub.s32 5, %v2384
    %v2386 = vrot.slane %v2335, %v2385
    %v2387 = vlaneseq
    %v2388 = vshrl.u32 %v2387, 7
    %v2389 = vsub.s32 1, %v2388
    %v2390 = vrot.slane %v2336, %v2389
    %v2391 = vlaneseq
    %v2392 = vshrl.u32 %v2391, 7
    %v2393 = vsub.s32 5, %v2392
    %v2394 = vrot.slane %v2336, %v2393
    %v2395 = vlaneseq
    %v2396 = vshrl.u32 %v2395, 7
    %v2397 = vsub.s32 1, %v2396
    %v2398 = vrot.slane %v2337, %v2397
    %v2399 = vlaneseq
    %v2400 = vshrl.u32 %v2399, 7
    %v2401 = vsub.s32 5, %v2400
    %v2402 = vrot.slane %v2337, %v2401
    %v2403 = vlaneseq
    %v2404 = vshrl.u32 %v2403, 7
    %v2405 = vsub.s32 1, %v2404
    %v2406 = vrot.slane %v2338, %v2405
    %v2407 = vlaneseq
    %v2408 = vshrl.u32 %v2407, 7
    %v2409 = vsub.s32 5, %v2408
    %v2410 = vrot.slane %v2338, %v2409
    %v2411 = vsel %vm249, %v2358, %v2350
    %v2412 = vsel %vm251, %v2366, %v2411
    %v2413 = vsel %vm253, %v2374, %v2412
    %v2414 = vsel %vm255, %v2382, %v2413
    %v2415 = vsel %vm257, %v2390, %v2414
    %v2416 = vsel %vm259, %v2398, %v2415
    %v2417 = vsel %vm261, %v2406, %v2416
    %v2418 = vsel %vm249, %v2362, %v2354
    %v2419 = vsel %vm251, %v2370, %v2418
    %v2420 = vsel %vm253, %v2378, %v2419
    %v2421 = vsel %vm255, %v2386, %v2420
    %v2422 = vsel %vm257, %v2394, %v2421
    %v2423 = vsel %vm259, %v2402, %v2422
    %v2424 = vsel %vm261, %v2410, %v2423
    %2427 = vrot.lane.b32.xlu0 %v2417, 112
    %v2428 = vpop.permute.xlu0 %2427
    %2429 = vrot.lane.b32.xlu0 %v2424, 112
    %v2430 = vpop.permute.xlu0 %2429
    %v2431 = vsel %vm276, %v2428, %v2430
    %v2432 = vsel %vm276, %v2430, %v2428
    %2433 = vrot.lane.b32.xlu0 %v2417, 16
    %v2434 = vpop.permute.xlu0 %2433
    %2435 = vrot.lane.b32.xlu0 %v2424, 16
    %v2436 = vpop.permute.xlu0 %2435
    %v2437 = vsel %vm283, %v2434, %v2436
    %v2438 = vsel %vm283, %v2436, %v2434
    %v2441 = vcombine.low %v2438, %v2437
    %v2442 = vcombine.high %v2438, %v2437
    %v2443 = vrot.slane %v2441, 5
    %v2444 = vrot.slane %v2441, 6
    %v2445 = vrot.slane %v2441, 7
    %v2446 = vrot.slane %v2442, 5
    %v2447 = vrot.slane %v2442, 6
    %v2448 = vrot.slane %v2442, 7
    %v2457 = vrot.slane %v2331, 6
    %v2458 = vrot.slane %v2332, 6
    %v2459 = vrot.slane %v2333, 6
    %v2460 = vrot.slane %v2334, 6
    %v2461 = vrot.slane %v2335, 6
    %v2462 = vrot.slane %v2336, 6
    %v2463 = vrot.slane %v2337, 6
    %v2464 = vrot.slane %v2338, 6
    %v2473 = vsel %vm82, %v2443, %v2457
    %v2474 = vsel %vm82, %v2444, %v2458
    %v2475 = vsel %vm82, %v2445, %v2459
    %v2476 = vsel %vm82, %v2441, %v2460
    %v2477 = vsel %vm82, %v2446, %v2461
    %v2478 = vsel %vm82, %v2447, %v2462
    %v2479 = vsel %vm82, %v2448, %v2463
    %v2480 = vsel %vm82, %v2442, %v2464
    %v2483 = vcombine.low %v2431, %v2432
    %v2484 = vcombine.high %v2431, %v2432
    %v2485 = vrot.slane %v2483, 6
    %v2486 = vrot.slane %v2483, 7
    %v2487 = vrot.slane %v2483, 1
    %v2488 = vrot.slane %v2484, 6
    %v2489 = vrot.slane %v2484, 7
    %v2490 = vrot.slane %v2484, 1
    %v2507 = vrot.slane %v2473, 5
    %v2508 = vrot.slane %v2507, 4
    %v2509 = vrot.slane %v2474, 5
    %v2510 = vrot.slane %v2509, 4
    %v2511 = vrot.slane %v2475, 5
    %v2512 = vrot.slane %v2511, 4
    %v2513 = vrot.slane %v2476, 5
    %v2514 = vrot.slane %v2513, 4
    %v2515 = vrot.slane %v2477, 5
    %v2516 = vrot.slane %v2515, 4
    %v2517 = vrot.slane %v2478, 5
    %v2518 = vrot.slane %v2517, 4
    %v2519 = vrot.slane %v2479, 5
    %v2520 = vrot.slane %v2519, 4
    %v2521 = vrot.slane %v2480, 5
    %v2522 = vrot.slane %v2521, 4
    %v2531 = vsel %vm82, %v2485, %v2508
    %v2532 = vsel %vm82, %v2486, %v2510
    %v2533 = vsel %vm82, %v2483, %v2512
    %v2534 = vsel %vm82, %v2487, %v2514
    %v2535 = vsel %vm82, %v2488, %v2516
    %v2536 = vsel %vm82, %v2489, %v2518
    %v2537 = vsel %vm82, %v2484, %v2520
    %v2538 = vsel %vm82, %v2490, %v2522
    %v2547 = vlaneseq
    %v2548 = vshrl.u32 %v2547, 7
    %v2549 = vsub.s32 2, %v2548
    %v2550 = vrot.slane %v2531, %v2549
    %v2551 = vlaneseq
    %v2552 = vshrl.u32 %v2551, 7
    %v2553 = vsub.s32 6, %v2552
    %v2554 = vrot.slane %v2531, %v2553
    %v2555 = vlaneseq
    %v2556 = vshrl.u32 %v2555, 7
    %v2557 = vsub.s32 2, %v2556
    %v2558 = vrot.slane %v2532, %v2557
    %v2559 = vlaneseq
    %v2560 = vshrl.u32 %v2559, 7
    %v2561 = vsub.s32 6, %v2560
    %v2562 = vrot.slane %v2532, %v2561
    %v2563 = vlaneseq
    %v2564 = vshrl.u32 %v2563, 7
    %v2565 = vsub.s32 2, %v2564
    %v2566 = vrot.slane %v2533, %v2565
    %v2567 = vlaneseq
    %v2568 = vshrl.u32 %v2567, 7
    %v2569 = vsub.s32 6, %v2568
    %v2570 = vrot.slane %v2533, %v2569
    %v2571 = vlaneseq
    %v2572 = vshrl.u32 %v2571, 7
    %v2573 = vsub.s32 2, %v2572
    %v2574 = vrot.slane %v2534, %v2573
    %v2575 = vlaneseq
    %v2576 = vshrl.u32 %v2575, 7
    %v2577 = vsub.s32 6, %v2576
    %v2578 = vrot.slane %v2534, %v2577
    %v2579 = vlaneseq
    %v2580 = vshrl.u32 %v2579, 7
    %v2581 = vsub.s32 2, %v2580
    %v2582 = vrot.slane %v2535, %v2581
    %v2583 = vlaneseq
    %v2584 = vshrl.u32 %v2583, 7
    %v2585 = vsub.s32 6, %v2584
    %v2586 = vrot.slane %v2535, %v2585
    %v2587 = vlaneseq
    %v2588 = vshrl.u32 %v2587, 7
    %v2589 = vsub.s32 2, %v2588
    %v2590 = vrot.slane %v2536, %v2589
    %v2591 = vlaneseq
    %v2592 = vshrl.u32 %v2591, 7
    %v2593 = vsub.s32 6, %v2592
    %v2594 = vrot.slane %v2536, %v2593
    %v2595 = vlaneseq
    %v2596 = vshrl.u32 %v2595, 7
    %v2597 = vsub.s32 2, %v2596
    %v2598 = vrot.slane %v2537, %v2597
    %v2599 = vlaneseq
    %v2600 = vshrl.u32 %v2599, 7
    %v2601 = vsub.s32 6, %v2600
    %v2602 = vrot.slane %v2537, %v2601
    %v2603 = vlaneseq
    %v2604 = vshrl.u32 %v2603, 7
    %v2605 = vsub.s32 2, %v2604
    %v2606 = vrot.slane %v2538, %v2605
    %v2607 = vlaneseq
    %v2608 = vshrl.u32 %v2607, 7
    %v2609 = vsub.s32 6, %v2608
    %v2610 = vrot.slane %v2538, %v2609
    %v2611 = vsel %vm249, %v2558, %v2550
    %v2612 = vsel %vm251, %v2566, %v2611
    %v2613 = vsel %vm253, %v2574, %v2612
    %v2614 = vsel %vm255, %v2582, %v2613
    %v2615 = vsel %vm257, %v2590, %v2614
    %v2616 = vsel %vm259, %v2598, %v2615
    %v2617 = vsel %vm261, %v2606, %v2616
    %v2618 = vsel %vm249, %v2562, %v2554
    %v2619 = vsel %vm251, %v2570, %v2618
    %v2620 = vsel %vm253, %v2578, %v2619
    %v2621 = vsel %vm255, %v2586, %v2620
    %v2622 = vsel %vm257, %v2594, %v2621
    %v2623 = vsel %vm259, %v2602, %v2622
    %v2624 = vsel %vm261, %v2610, %v2623
    %2627 = vrot.lane.b32.xlu0 %v2617, 1
    %v2628 = vpop.permute.xlu0 %2627
    %2629 = vrot.lane.b32.xlu0 %v2624, 1
    %v2630 = vpop.permute.xlu0 %2629
    %v2631 = vsel %vm78, %v2628, %v2630
    %v2632 = vsel %vm78, %v2630, %v2628
    %v2633 = vmul.f32 %v483, %v2632
    %v2634 = vmul.f32 %v487, %v2631
    %2635 = vrot.lane.b32.xlu0 %v2617, 127
    %v2636 = vpop.permute.xlu0 %2635
    %2637 = vrot.lane.b32.xlu0 %v2624, 127
    %v2638 = vpop.permute.xlu0 %2637
    %v2639 = vsel %vm71, %v2636, %v2638
    %v2640 = vsel %vm71, %v2638, %v2636
    %v2641 = vmul.f32 %v499, %v2639
    %v2642 = vmul.f32 %v503, %v2640
    %2643 = vrot.lane.b32.xlu0 %v2617, 2
    %v2644 = vpop.permute.xlu0 %2643
    %2645 = vrot.lane.b32.xlu0 %v2624, 2
    %v2646 = vpop.permute.xlu0 %2645
    %v2647 = vsel %vm510, %v2644, %v2646
    %v2648 = vsel %vm510, %v2646, %v2644
    %v2649 = vmul.f32 %v516, %v2648
    %v2650 = vmul.f32 %v520, %v2647
    %2651 = vrot.lane.b32.xlu0 %v2617, 126
    %v2652 = vpop.permute.xlu0 %2651
    %2653 = vrot.lane.b32.xlu0 %v2624, 126
    %v2654 = vpop.permute.xlu0 %2653
    %v2655 = vsel %vm527, %v2652, %v2654
    %v2656 = vsel %vm527, %v2654, %v2652
    %v2657 = vmul.f32 %v533, %v2655
    %v2658 = vmul.f32 %v537, %v2656
    %2659 = vrot.lane.b32.xlu0 %v2617, 16
    %v2660 = vpop.permute.xlu0 %2659
    %2661 = vrot.lane.b32.xlu0 %v2624, 16
    %v2662 = vpop.permute.xlu0 %2661
    %v2663 = vsel %vm283, %v2660, %v2662
    %v2664 = vsel %vm283, %v2662, %v2660
    %v2665 = vmul.f32 %v549, %v2664
    %v2666 = vmul.f32 %v553, %v2663
    %2667 = vrot.lane.b32.xlu0 %v2617, 112
    %v2668 = vpop.permute.xlu0 %2667
    %2669 = vrot.lane.b32.xlu0 %v2624, 112
    %v2670 = vpop.permute.xlu0 %2669
    %v2671 = vsel %vm276, %v2668, %v2670
    %v2672 = vsel %vm276, %v2670, %v2668
    %v2673 = vmul.f32 %v565, %v2671
    %v2674 = vmul.f32 %v569, %v2672
    %2675 = vrot.lane.b32.xlu0 %v2617, 32
    %v2676 = vpop.permute.xlu0 %2675
    %2677 = vrot.lane.b32.xlu0 %v2624, 32
    %v2678 = vpop.permute.xlu0 %2677
    %v2679 = vsel %vm576, %v2676, %v2678
    %v2680 = vsel %vm576, %v2678, %v2676
    %v2681 = vmul.f32 %v582, %v2680
    %v2682 = vmul.f32 %v586, %v2679
    %2683 = vrot.lane.b32.xlu0 %v2617, 96
    %v2684 = vpop.permute.xlu0 %2683
    %2685 = vrot.lane.b32.xlu0 %v2624, 96
    %v2686 = vpop.permute.xlu0 %2685
    %v2687 = vsel %vm593, %v2684, %v2686
    %v2688 = vsel %vm593, %v2686, %v2684
    %v2689 = vmul.f32 %v599, %v2687
    %v2690 = vmul.f32 %v603, %v2688
    %v2691 = vadd.f32 %v2633, %v2641
    %v2692 = vadd.f32 %v2634, %v2642
    %v2693 = vadd.f32 %v2649, %v2657
    %v2694 = vadd.f32 %v2650, %v2658
    %v2695 = vadd.f32 %v2691, %v2693
    %v2696 = vadd.f32 %v2692, %v2694
    %v2697 = vadd.f32 %v2665, %v2673
    %v2698 = vadd.f32 %v2666, %v2674
    %v2699 = vadd.f32 %v2681, %v2689
    %v2700 = vadd.f32 %v2682, %v2690
    %v2701 = vadd.f32 %v2697, %v2699
    %v2702 = vadd.f32 %v2698, %v2700
    %v2703 = vadd.f32 %v2695, %v2701
    %v2704 = vadd.f32 %v2696, %v2702
    %v2705 = vmul.f32 %v620, %v2531
    %v2706 = vmul.f32 %v620, %v2532
    %v2707 = vmul.f32 %v620, %v2533
    %v2708 = vmul.f32 %v620, %v2534
    %v2709 = vmul.f32 %v620, %v2535
    %v2710 = vmul.f32 %v620, %v2536
    %v2711 = vmul.f32 %v620, %v2537
    %v2712 = vmul.f32 %v620, %v2538
    %v2721 = vlaneseq
    %v2722 = vshrl.u32 %v2721, 7
    %v2723 = vsub.s32 2, %v2722
    %v2724 = vrot.slane %v2705, %v2723
    %v2725 = vlaneseq
    %v2726 = vshrl.u32 %v2725, 7
    %v2727 = vsub.s32 6, %v2726
    %v2728 = vrot.slane %v2705, %v2727
    %v2729 = vlaneseq
    %v2730 = vshrl.u32 %v2729, 7
    %v2731 = vsub.s32 2, %v2730
    %v2732 = vrot.slane %v2706, %v2731
    %v2733 = vlaneseq
    %v2734 = vshrl.u32 %v2733, 7
    %v2735 = vsub.s32 6, %v2734
    %v2736 = vrot.slane %v2706, %v2735
    %v2737 = vlaneseq
    %v2738 = vshrl.u32 %v2737, 7
    %v2739 = vsub.s32 2, %v2738
    %v2740 = vrot.slane %v2707, %v2739
    %v2741 = vlaneseq
    %v2742 = vshrl.u32 %v2741, 7
    %v2743 = vsub.s32 6, %v2742
    %v2744 = vrot.slane %v2707, %v2743
    %v2745 = vlaneseq
    %v2746 = vshrl.u32 %v2745, 7
    %v2747 = vsub.s32 2, %v2746
    %v2748 = vrot.slane %v2708, %v2747
    %v2749 = vlaneseq
    %v2750 = vshrl.u32 %v2749, 7
    %v2751 = vsub.s32 6, %v2750
    %v2752 = vrot.slane %v2708, %v2751
    %v2753 = vlaneseq
    %v2754 = vshrl.u32 %v2753, 7
    %v2755 = vsub.s32 2, %v2754
    %v2756 = vrot.slane %v2709, %v2755
    %v2757 = vlaneseq
    %v2758 = vshrl.u32 %v2757, 7
    %v2759 = vsub.s32 6, %v2758
    %v2760 = vrot.slane %v2709, %v2759
    %v2761 = vlaneseq
    %v2762 = vshrl.u32 %v2761, 7
    %v2763 = vsub.s32 2, %v2762
    %v2764 = vrot.slane %v2710, %v2763
    %v2765 = vlaneseq
    %v2766 = vshrl.u32 %v2765, 7
    %v2767 = vsub.s32 6, %v2766
    %v2768 = vrot.slane %v2710, %v2767
    %v2769 = vlaneseq
    %v2770 = vshrl.u32 %v2769, 7
    %v2771 = vsub.s32 2, %v2770
    %v2772 = vrot.slane %v2711, %v2771
    %v2773 = vlaneseq
    %v2774 = vshrl.u32 %v2773, 7
    %v2775 = vsub.s32 6, %v2774
    %v2776 = vrot.slane %v2711, %v2775
    %v2777 = vlaneseq
    %v2778 = vshrl.u32 %v2777, 7
    %v2779 = vsub.s32 2, %v2778
    %v2780 = vrot.slane %v2712, %v2779
    %v2781 = vlaneseq
    %v2782 = vshrl.u32 %v2781, 7
    %v2783 = vsub.s32 6, %v2782
    %v2784 = vrot.slane %v2712, %v2783
    %v2785 = vsel %vm249, %v2732, %v2724
    %v2786 = vsel %vm251, %v2740, %v2785
    %v2787 = vsel %vm253, %v2748, %v2786
    %v2788 = vsel %vm255, %v2756, %v2787
    %v2789 = vsel %vm257, %v2764, %v2788
    %v2790 = vsel %vm259, %v2772, %v2789
    %v2791 = vsel %vm261, %v2780, %v2790
    %v2792 = vsel %vm249, %v2736, %v2728
    %v2793 = vsel %vm251, %v2744, %v2792
    %v2794 = vsel %vm253, %v2752, %v2793
    %v2795 = vsel %vm255, %v2760, %v2794
    %v2796 = vsel %vm257, %v2768, %v2795
    %v2797 = vsel %vm259, %v2776, %v2796
    %v2798 = vsel %vm261, %v2784, %v2797
    %v2801 = vadd.f32 %v2703, %v2791
    %v2802 = vadd.f32 %v2704, %v2798
    %v2803 = vadd.f32 %v2109, %v2801
    %v2804 = vadd.f32 %v2110, %v2802
    %v2805 = vmul.f32 %v2803, 0.083333336
    %v2806 = vmul.f32 %v2804, 0.083333336
    %v2809 = vcombine.low %v2805, %v2806
    %v2810 = vcombine.high %v2805, %v2806
    %v2811 = vrot.slane %v2809, 6
    %v2812 = vrot.slane %v2809, 7
    %v2813 = vrot.slane %v2809, 1
    %v2814 = vrot.slane %v2810, 6
    %v2815 = vrot.slane %v2810, 7
    %v2816 = vrot.slane %v2810, 1
    %v2825 = vadd.f32 %v378, %v2811
    %v2826 = vadd.f32 %v379, %v2812
    %v2827 = vadd.f32 %v380, %v2809
    %v2828 = vadd.f32 %v381, %v2813
    %v2829 = vadd.f32 %v382, %v2814
    %v2830 = vadd.f32 %v383, %v2815
    %v2831 = vadd.f32 %v384, %v2810
    %v2832 = vadd.f32 %v385, %v2816
    %v2841 = vlaneseq
    %v2842 = vshrl.u32 %v2841, 7
    %v2843 = vsub.s32 2, %v2842
    %v2844 = vrot.slane %v2825, %v2843
    %v2845 = vlaneseq
    %v2846 = vshrl.u32 %v2845, 7
    %v2847 = vsub.s32 6, %v2846
    %v2848 = vrot.slane %v2825, %v2847
    %v2849 = vlaneseq
    %v2850 = vshrl.u32 %v2849, 7
    %v2851 = vsub.s32 2, %v2850
    %v2852 = vrot.slane %v2826, %v2851
    %v2853 = vlaneseq
    %v2854 = vshrl.u32 %v2853, 7
    %v2855 = vsub.s32 6, %v2854
    %v2856 = vrot.slane %v2826, %v2855
    %v2857 = vlaneseq
    %v2858 = vshrl.u32 %v2857, 7
    %v2859 = vsub.s32 2, %v2858
    %v2860 = vrot.slane %v2827, %v2859
    %v2861 = vlaneseq
    %v2862 = vshrl.u32 %v2861, 7
    %v2863 = vsub.s32 6, %v2862
    %v2864 = vrot.slane %v2827, %v2863
    %v2865 = vlaneseq
    %v2866 = vshrl.u32 %v2865, 7
    %v2867 = vsub.s32 2, %v2866
    %v2868 = vrot.slane %v2828, %v2867
    %v2869 = vlaneseq
    %v2870 = vshrl.u32 %v2869, 7
    %v2871 = vsub.s32 6, %v2870
    %v2872 = vrot.slane %v2828, %v2871
    %v2873 = vlaneseq
    %v2874 = vshrl.u32 %v2873, 7
    %v2875 = vsub.s32 2, %v2874
    %v2876 = vrot.slane %v2829, %v2875
    %v2877 = vlaneseq
    %v2878 = vshrl.u32 %v2877, 7
    %v2879 = vsub.s32 6, %v2878
    %v2880 = vrot.slane %v2829, %v2879
    %v2881 = vlaneseq
    %v2882 = vshrl.u32 %v2881, 7
    %v2883 = vsub.s32 2, %v2882
    %v2884 = vrot.slane %v2830, %v2883
    %v2885 = vlaneseq
    %v2886 = vshrl.u32 %v2885, 7
    %v2887 = vsub.s32 6, %v2886
    %v2888 = vrot.slane %v2830, %v2887
    %v2889 = vlaneseq
    %v2890 = vshrl.u32 %v2889, 7
    %v2891 = vsub.s32 2, %v2890
    %v2892 = vrot.slane %v2831, %v2891
    %v2893 = vlaneseq
    %v2894 = vshrl.u32 %v2893, 7
    %v2895 = vsub.s32 6, %v2894
    %v2896 = vrot.slane %v2831, %v2895
    %v2897 = vlaneseq
    %v2898 = vshrl.u32 %v2897, 7
    %v2899 = vsub.s32 2, %v2898
    %v2900 = vrot.slane %v2832, %v2899
    %v2901 = vlaneseq
    %v2902 = vshrl.u32 %v2901, 7
    %v2903 = vsub.s32 6, %v2902
    %v2904 = vrot.slane %v2832, %v2903
    %v2905 = vsel %vm249, %v2852, %v2844
    %v2906 = vsel %vm251, %v2860, %v2905
    %v2907 = vsel %vm253, %v2868, %v2906
    %v2908 = vsel %vm255, %v2876, %v2907
    %v2909 = vsel %vm257, %v2884, %v2908
    %v2910 = vsel %vm259, %v2892, %v2909
    %v2911 = vsel %vm261, %v2900, %v2910
    %v2912 = vsel %vm249, %v2856, %v2848
    %v2913 = vsel %vm251, %v2864, %v2912
    %v2914 = vsel %vm253, %v2872, %v2913
    %v2915 = vsel %vm255, %v2880, %v2914
    %v2916 = vsel %vm257, %v2888, %v2915
    %v2917 = vsel %vm259, %v2896, %v2916
    %v2918 = vsel %vm261, %v2904, %v2917
    %2921 = vst [vmem:[#allocation9] sm:$0xff] %v2911
    %2922 = vst [vmem:[#allocation9 + $0x8] sm:$0xff] %v2918
    // Predicated region
    $region30: #{tpu_custom_call.1} parent=1 // pred_check
      _
    $region31: #{tpu_custom_call.1} parent=1 // pred_check_branch
      %2924 = sbr.rel (0) target = $region33
    $region32: #{tpu_custom_call.1} parent=1 // pred_region
      %s2926 = ssub.s32 256, 256
      %2927 = vsyncadd [#allocation5], %s2926
      %s2929 = sshll.u32 [#allocation9], 4
      %s2930 = int_to_ptr.vmem [resolvable:$true] %s2929
      %2932 = dma.vmem_to_hbm [thread:$0]  %s2930, 256, %s4, [#allocation5]
    $region33: #{tpu_custom_call.1} parent=1 // pred_fallthru
      _
    // Predicated region
    $region34: #{tpu_custom_call.1} parent=1 // pred_check
      _
    $region35: #{tpu_custom_call.1} parent=1 // pred_check_branch
      %2934 = sbr.rel (0) target = $region37
    $region36: #{tpu_custom_call.1} parent=1 // pred_region
      %2935 = dma.done [#allocation5], 256
    $region37: #{tpu_custom_call.1} parent=1 // pred_fallthru
      _
    %2936 = vsyncpa [#allocation4], 1
    %2937 = vsyncpa [#allocation7], 1
    %2938 = vsyncpa [#allocation5], 1

</llo_original>
